<compile_context>
chip_gen: v7x
topology: tpu7x:2x2x1
jax: 0.10.0
libtpu: 0.0.40
codegen_flags: <defaults>
</compile_context>

<pallas_src>
import functools

import jax
import jax.numpy as jnp
from jax.experimental import pallas as pl
from jax.experimental.pallas import tpu as pltpu

CMAX = 8      # widest activation channel count across all fused layers
HIDDEN = 8    # hidden width of the UnetV2 stand-in
KCOLS = 9 * CMAX  # im2col contraction depth (9 taps x padded channels)


# --------------------------------------------------------------------------
# In-kernel conv helper (pure value computation, channel-major / lane-dense)
# --------------------------------------------------------------------------
def _conv3x3(x, w_slab, b, edge_l, edge_r, width, relu):
    """3x3 'same' conv on a channel-major flat activation.

    x      : (CMAX, H*W) f32 value, spatial flattened row-major on the lane axis.
    w_slab : (CMAX, 72) bf16; column index = (kh*3+kw)*CMAX + cin (zero-padded).
    b      : (CMAX, 1) f32 (zero-padded).
    edge_l / edge_r : (1, H*W) f32 masks, zero at output columns 0 / W-1.
        They kill the row-wrap artifacts of shifting the flattened image; the
        top/bottom out-of-range taps read the zero margins concatenated below.
    Returns (CMAX, H*W) f32.
    """
    c, hw = x.shape
    zpad = jnp.zeros((c, width + 1), x.dtype)
    xp = jnp.concatenate([zpad, x, zpad], axis=1)        # (C, HW + 2W + 2)

    taps = []
    for kh in range(3):
        for kw in range(3):
            off = kh * width + kw                        # shifted lane slice
            tap = xp[:, off:off + hw]                    # (C, HW)
            if kw == 0:
                tap = tap * edge_l
            elif kw == 2:
                tap = tap * edge_r
            taps.append(tap)

    # One im2col operand, one MXU matmul (K = 72), f32 accumulation.
    col = jnp.concatenate(taps, axis=0).astype(jnp.bfloat16)   # (72, HW)
    out = jnp.dot(w_slab, col, preferred_element_type=jnp.float32) + b
    return jnp.maximum(out, 0.0) if relu else out


# --------------------------------------------------------------------------
# Fused kernels
# --------------------------------------------------------------------------
def _encode_kernel(mask_ref, bg_ref, face_ref, edge_ref, w_ref, b_ref,
                   out_bg_ref, zero_ref, *, width):
    hw = bg_ref.shape[2]
    edge_l = edge_ref[0:1, :]
    edge_r = edge_ref[1:2, :]

    # ---- preprocess UNet: face (3) -> 8 -> 8 -> 3 ------------------------
    x = jnp.concatenate(
        [face_ref[0].astype(jnp.float32), jnp.zeros((CMAX - 3, hw), jnp.float32)],
        axis=0)
    h = _conv3x3(x, w_ref[0], b_ref[0], edge_l, edge_r, width, True)
    h = _conv3x3(h, w_ref[1], b_ref[1], edge_l, edge_r, width, True)
    face_pro = _conv3x3(h, w_ref[2], b_ref[2], edge_l, edge_r, width, False)
    # rows 3:8 of face_pro are exactly zero (zero-padded weight rows / bias).

    # ---- encoder UNet on cat([bg, face_pro]) (6) -> 8 -> 8 -> 3 ----------
    x = jnp.concatenate(
        [bg_ref[0].astype(jnp.float32), face_pro[0:3],
         jnp.zeros((CMAX - 6, hw), jnp.float32)], axis=0)
    h = _conv3x3(x, w_ref[3], b_ref[3], edge_l, edge_r, width, True)
    h = _conv3x3(h, w_ref[4], b_ref[4], edge_l, edge_r, width, True)
    out = _conv3x3(h, w_ref[5], b_ref[5], edge_l, edge_r, width, False)

    # ---- mask epilogue: outputs are already lane-dense (C, H*W) ----------
    out3 = out[0:3]
    m = mask_ref[0].astype(jnp.float32)                  # (Cm, HW)
    out_bg_ref[0] = (out3 * (1.0 - m)).astype(out_bg_ref.dtype)
    zero_ref[0] = (out3 * m).astype(zero_ref.dtype)


def _decode_kernel(mask_ref, bg_ref, edge_ref, w_ref, b_ref,
                   out_ref, out_face_ref, *, width):
    hw = bg_ref.shape[2]
    edge_l = edge_ref[0:1, :]
    edge_r = edge_ref[1:2, :]

    # ---- decoder UNet: bg (3) -> 8 -> 8 -> 3 ------------------------------
    x = jnp.concatenate(
        [bg_ref[0].astype(jnp.float32), jnp.zeros((CMAX - 3, hw), jnp.float32)],
        axis=0)
    h = _conv3x3(x, w_ref[0], b_ref[0], edge_l, edge_r, width, True)
    h = _conv3x3(h, w_ref[1], b_ref[1], edge_l, edge_r, width, True)
    out = _conv3x3(h, w_ref[2], b_ref[2], edge_l, edge_r, width, False)

    out3 = out[0:3]
    m = mask_ref[0].astype(jnp.float32)
    out_ref[0] = out3.astype(out_ref.dtype)
    out_face_ref[0] = (out3 * m).astype(out_face_ref.dtype)


# --------------------------------------------------------------------------
# Host wrappers (NCHW <-> (N, C, H*W) is a free reshape, no transposes)
# --------------------------------------------------------------------------
def _batch_spec(shape):
    ndim = len(shape)
    return pl.BlockSpec((1,) + tuple(shape[1:]),
                        lambda n: (n,) + (0,) * (ndim - 1))


def _full_spec(shape):
    ndim = len(shape)
    return pl.BlockSpec(tuple(shape), lambda n: (0,) * ndim)


def _edge_masks(H, W):
    col = jnp.arange(H * W, dtype=jnp.int32) % W
    return jnp.stack([(col != 0), (col != W - 1)]).astype(jnp.float32)  # (2, HW)


def _vmem_limit(hw):
    # im2col (72,HW) f32 + bf16 copy + a few (8,HW) activations + double-
    # buffered I/O blocks, with generous slack; capped under v7x's 64 MiB.
    return int(min(48 * 2 ** 20, 4 * 2 ** 20 + 1024 * hw))


@jax.jit
def fused_encode(w_slab, b_slab, mask, bg, face):
    """rev=False: out = encoder(cat(bg, preprocess(face))); split by mask."""
    N, _, H, W = bg.shape
    HW = H * W
    mask2 = mask.reshape(N, mask.shape[1], HW)
    bg2 = bg.reshape(N, 3, HW)
    face2 = face.reshape(N, 3, HW)
    edge = _edge_masks(H, W)

    out_bg, zero_region = pl.pallas_call(
        functools.partial(_encode_kernel, width=W),
        out_shape=(jax.ShapeDtypeStruct((N, 3, HW), bg.dtype),
                   jax.ShapeDtypeStruct((N, 3, HW), bg.dtype)),
        grid=(N,),
        in_specs=[_batch_spec(mask2.shape), _batch_spec(bg2.shape),
                  _batch_spec(face2.shape), _full_spec(edge.shape),
                  _full_spec(w_slab.shape), _full_spec(b_slab.shape)],
        out_specs=(_batch_spec((N, 3, HW)), _batch_spec((N, 3, HW))),
        compiler_params=pltpu.CompilerParams(
            dimension_semantics=("parallel",),
            vmem_limit_bytes=_vmem_limit(HW)),
    )(mask2, bg2, face2, edge, w_slab, b_slab)
    return out_bg.reshape(N, 3, H, W), zero_region.reshape(N, 3, H, W)


@jax.jit
def fused_decode(w_slab, b_slab, mask, bg):
    """rev=True: out = decoder(bg); out_face = out * mask."""
    N, _, H, W = bg.shape
    HW = H * W
    mask2 = mask.reshape(N, mask.shape[1], HW)
    bg2 = bg.reshape(N, 3, HW)
    edge = _edge_masks(H, W)

    out, out_face = pl.pallas_call(
        functools.partial(_decode_kernel, width=W),
        out_shape=(jax.ShapeDtypeStruct((N, 3, HW), bg.dtype),
                   jax.ShapeDtypeStruct((N, 3, HW), bg.dtype)),
        grid=(N,),
        in_specs=[_batch_spec(mask2.shape), _batch_spec(bg2.shape),
                  _full_spec(edge.shape), _full_spec(w_slab.shape),
                  _full_spec(b_slab.shape)],
        out_specs=(_batch_spec((N, 3, HW)), _batch_spec((N, 3, HW))),
        compiler_params=pltpu.CompilerParams(
            dimension_semantics=("parallel",),
            vmem_limit_bytes=_vmem_limit(HW)),
    )(mask2, bg2, edge, w_slab, b_slab)
    return out.reshape(N, 3, H, W), out_face.reshape(N, 3, H, W)


# --------------------------------------------------------------------------
# UnetV2 stand-in parameters + Model
# --------------------------------------------------------------------------
def init_unet(key, in_ch, hidden=HIDDEN, out_ch=3):
    k1, k2, k3 = jax.random.split(key, 3)
    return {
        "w1": jax.random.normal(k1, (3, 3, in_ch, hidden), jnp.float32) * 0.1,
        "b1": jnp.zeros((hidden,), jnp.float32),
        "w2": jax.random.normal(k2, (3, 3, hidden, hidden), jnp.float32) * 0.1,
        "b2": jnp.zeros((hidden,), jnp.float32),
        "w3": jax.random.normal(k3, (3, 3, hidden, out_ch), jnp.float32) * 0.1,
        "b3": jnp.zeros((out_ch,), jnp.float32),
    }


def pack_unet_params(p):
    """Kernel-ready params, packed per network:
       weights -> (3, CMAX, 72) bf16 with column index (kh*3+kw)*CMAX + cin and
       both cin/cout zero-padded to CMAX; biases -> (3, CMAX, 1) f32."""
    def prep_w(w):
        cin, cout = w.shape[2], w.shape[3]
        wp = jnp.zeros((3, 3, CMAX, CMAX), jnp.float32).at[:, :, :cin, :cout].set(w)
        # (kh, kw, ci, co) -> (co, kh, kw, ci) -> (CMAX, 72)
        return wp.transpose(3, 0, 1, 2).reshape(CMAX, KCOLS).astype(jnp.bfloat16)

    def prep_b(b):
        cout = b.shape[0]
        return jnp.zeros((CMAX,), jnp.float32).at[:cout].set(b).reshape(CMAX, 1)

    w_slab = jnp.stack([prep_w(p["w1"]), prep_w(p["w2"]), prep_w(p["w3"])])
    b_slab = jnp.stack([prep_b(p["b1"]), prep_b(p["b2"]), prep_b(p["b3"])])
    return w_slab, b_slab


class Model:
    def __init__(self, key):
        kp, ke, kd = jax.random.split(key, 3)
        self.raw_preprocess = init_unet(kp, 3)   # UnetV2(3)
        self.raw_encoder = init_unet(ke, 6)      # UnetV2(6)
        self.raw_decoder = init_unet(kd, 3)      # UnetV2(3)
        # Pack once at init; encode path gets ONE weight slab + ONE bias slab.
        pw, pb = pack_unet_params(self.raw_preprocess)
        ew, eb = pack_unet_params(self.raw_encoder)
        dw, db = pack_unet_params(self.raw_decoder)
        self.enc_w = jnp.concatenate([pw, ew], axis=0)   # (6, 8, 72) bf16
        self.enc_b = jnp.concatenate([pb, eb], axis=0)   # (6, 8, 1)  f32
        self.dec_w, self.dec_b = dw, db                  # (3, 8, 72) / (3, 8, 1)

    def forward(self, mask, bg, face=None, rev=False):
        # mask / bg / face are NCHW (PyTorch convention); kernels consume and
        # produce (N, C, H*W) slabs, so the boundary is a free reshape.
        if not rev:
            out_bg, zero_region = fused_encode(self.enc_w, self.enc_b,
                                               mask, bg, face)
            return out_bg, zero_region, None
        else:
            out, out_face = fused_decode(self.dec_w, self.dec_b, mask, bg)
            return out, out_face


# --------------------------------------------------------------------------
# Pure-JAX f32 reference (loose numerical sanity check; kernel matmuls are bf16)
# --------------------------------------------------------------------------
def _conv3x3_ref(x_nchw, w, b, relu):
    out = jax.lax.conv_general_dilated(
        x_nchw, w, window_strides=(1, 1), padding="SAME",
        dimension_numbers=("NCHW", "HWIO", "NCHW"))
    out = out + b.reshape(1, -1, 1, 1)
    return jnp.maximum(out, 0.0) if relu else out


def _unet_ref(p, x_nchw):
    h = _conv3x3_ref(x_nchw, p["w1"], p["b1"], True)
    h = _conv3x3_ref(h, p["w2"], p["b2"], True)
    return _conv3x3_ref(h, p["w3"], p["b3"], False)


# --------------------------------------------------------------------------
if __name__ == "__main__":
    key = jax.random.PRNGKey(0)
    k_model, k_mask, k_bg, k_face = jax.random.split(key, 4)

    N, C, H, W = 2, 3, 16, 16
    mask = jax.random.uniform(k_mask, (N, 1, H, W), jnp.float32)
    bg = jax.random.normal(k_bg, (N, C, H, W), jnp.float32)
    face = jax.random.normal(k_face, (N, C, H, W), jnp.float32)

    model = Model(k_model)

    # forward (rev=False): (out_bg, zero_region, None)
    out_bg, zero_region, none_out = model.forward(mask, bg, face, rev=False)
    jax.block_until_ready((out_bg, zero_region))
    assert out_bg.shape == (N, C, H, W)
    assert zero_region.shape == (N, C, H, W)
    assert none_out is None

    # forward (rev=True): (out, out_face)
    out, out_face = model.forward(mask, bg, rev=True)
    jax.block_until_ready((out, out_face))
    assert out.shape == (N, C, H, W)
    assert out_face.shape == (N, C, H, W)

    # Loose numerical check vs. a pure-JAX f32 reference (kernel matmuls run
    # with bf16 operands, so tolerance is generous).
    face_pro_r = _unet_ref(model.raw_preprocess, face)
    out_r = _unet_ref(model.raw_encoder,
                      jnp.concatenate([bg, face_pro_r], axis=1))
    assert jnp.max(jnp.abs(out_bg - out_r * (1.0 - mask))) < 5e-2
    assert jnp.max(jnp.abs(zero_region - out_r * mask)) < 5e-2

    out_r2 = _unet_ref(model.raw_decoder, bg)
    assert jnp.max(jnp.abs(out - out_r2)) < 5e-2
    assert jnp.max(jnp.abs(out_face - out_r2 * mask)) < 5e-2

    print("KERNEL_OK")
</pallas_src>

<mosaic_0001>
module attributes {stable_mosaic.version = 11 : i64} {
  func.func @_encode_kernel(%arg0: i32, %arg1: memref<1x1x256xf32, #tpu.memory_space<vmem>>, %arg2: memref<1x3x256xf32, #tpu.memory_space<vmem>>, %arg3: memref<1x3x256xf32, #tpu.memory_space<vmem>>, %arg4: memref<2x256xf32, #tpu.memory_space<vmem>>, %arg5: memref<6x8x72xbf16, #tpu.memory_space<vmem>>, %arg6: memref<6x8x1xf32, #tpu.memory_space<vmem>>, %arg7: memref<1x3x256xf32, #tpu.memory_space<vmem>>, %arg8: memref<1x3x256xf32, #tpu.memory_space<vmem>>) attributes {dimension_semantics = [#tpu.dimension_semantics<parallel>], iteration_bounds = array<i64: 2>, scalar_prefetch = 0 : i64, scratch_operands = 0 : i64, tpu.core_type = #tpu.core_type<tc>, window_params = [{transform_indices = @transform_0, window_bounds = array<i64: 1, 1, 256>}, {transform_indices = @transform_1, window_bounds = array<i64: 1, 3, 256>}, {transform_indices = @transform_2, window_bounds = array<i64: 1, 3, 256>}, {pipeline_mode = #tpu.pipeline_mode<synchronous>, transform_indices = @transform_3, window_bounds = array<i64: 2, 256>}, {pipeline_mode = #tpu.pipeline_mode<synchronous>, transform_indices = @transform_4, window_bounds = array<i64: 6, 8, 72>}, {pipeline_mode = #tpu.pipeline_mode<synchronous>, transform_indices = @transform_5, window_bounds = array<i64: 6, 8, 1>}, {transform_indices = @transform_6, window_bounds = array<i64: 1, 3, 256>}, {transform_indices = @transform_7, window_bounds = array<i64: 1, 3, 256>}]} {
    %c0 = arith.constant 0 : index
    %c0_0 = arith.constant 0 : index
    %0 = vector.load %arg4[%c0, %c0_0] : memref<2x256xf32, #tpu.memory_space<vmem>>, vector<1x256xf32>
    %c1 = arith.constant 1 : index
    %c0_1 = arith.constant 0 : index
    %1 = vector.load %arg4[%c1, %c0_1] : memref<2x256xf32, #tpu.memory_space<vmem>>, vector<1x256xf32>
    %c0_2 = arith.constant 0 : index
    %c0_3 = arith.constant 0 : index
    %c0_4 = arith.constant 0 : index
    %2 = vector.load %arg3[%c0_2, %c0_3, %c0_4] : memref<1x3x256xf32, #tpu.memory_space<vmem>>, vector<1x3x256xf32>
    %3 = vector.shape_cast %2 : vector<1x3x256xf32> to vector<3x256xf32>
    %cst = arith.constant 0.000000e+00 : f32
    %4 = vector.broadcast %cst : f32 to vector<5x256xf32>
    %5 = tpu.concatenate %3, %4 in 0 : vector<3x256xf32>, vector<5x256xf32> -> vector<8x256xf32>
    %c0_5 = arith.constant 0 : index
    %c0_6 = arith.constant 0 : index
    %c0_7 = arith.constant 0 : index
    %6 = vector.load %arg5[%c0_5, %c0_6, %c0_7] : memref<6x8x72xbf16, #tpu.memory_space<vmem>>, vector<1x8x72xbf16>
    %7 = vector.shape_cast %6 : vector<1x8x72xbf16> to vector<8x72xbf16>
    %c0_8 = arith.constant 0 : index
    %c0_9 = arith.constant 0 : index
    %c0_10 = arith.constant 0 : index
    %8 = vector.load %arg6[%c0_8, %c0_9, %c0_10] : memref<6x8x1xf32, #tpu.memory_space<vmem>>, vector<1x8x1xf32>
    %9 = vector.shape_cast %8 : vector<1x8x1xf32> to vector<8x1xf32>
    %cst_11 = arith.constant 0.000000e+00 : f32
    %10 = vector.broadcast %cst_11 : f32 to vector<8x17xf32>
    %11 = tpu.concatenate %10, %5, %10 in 1 : vector<8x17xf32>, vector<8x256xf32>, vector<8x17xf32> -> vector<8x290xf32>
    %12 = vector.extract_strided_slice %11 {offsets = [0, 0], sizes = [8, 256], strides = [1, 1]} : vector<8x290xf32> to vector<8x256xf32>
    %13 = vector.broadcast %0 : vector<1x256xf32> to vector<8x256xf32>
    %14 = arith.mulf %12, %13 : vector<8x256xf32>
    %15 = vector.extract_strided_slice %11 {offsets = [0, 1], sizes = [8, 256], strides = [1, 1]} : vector<8x290xf32> to vector<8x256xf32>
    %16 = vector.extract_strided_slice %11 {offsets = [0, 2], sizes = [8, 256], strides = [1, 1]} : vector<8x290xf32> to vector<8x256xf32>
    %17 = vector.broadcast %1 : vector<1x256xf32> to vector<8x256xf32>
    %18 = arith.mulf %16, %17 : vector<8x256xf32>
    %19 = vector.extract_strided_slice %11 {offsets = [0, 16], sizes = [8, 256], strides = [1, 1]} : vector<8x290xf32> to vector<8x256xf32>
    %20 = vector.broadcast %0 : vector<1x256xf32> to vector<8x256xf32>
    %21 = arith.mulf %19, %20 : vector<8x256xf32>
    %22 = vector.extract_strided_slice %11 {offsets = [0, 17], sizes = [8, 256], strides = [1, 1]} : vector<8x290xf32> to vector<8x256xf32>
    %23 = vector.extract_strided_slice %11 {offsets = [0, 18], sizes = [8, 256], strides = [1, 1]} : vector<8x290xf32> to vector<8x256xf32>
    %24 = vector.broadcast %1 : vector<1x256xf32> to vector<8x256xf32>
    %25 = arith.mulf %23, %24 : vector<8x256xf32>
    %26 = vector.extract_strided_slice %11 {offsets = [0, 32], sizes = [8, 256], strides = [1, 1]} : vector<8x290xf32> to vector<8x256xf32>
    %27 = vector.broadcast %0 : vector<1x256xf32> to vector<8x256xf32>
    %28 = arith.mulf %26, %27 : vector<8x256xf32>
    %29 = vector.extract_strided_slice %11 {offsets = [0, 33], sizes = [8, 256], strides = [1, 1]} : vector<8x290xf32> to vector<8x256xf32>
    %30 = vector.extract_strided_slice %11 {offsets = [0, 34], sizes = [8, 256], strides = [1, 1]} : vector<8x290xf32> to vector<8x256xf32>
    %31 = vector.broadcast %1 : vector<1x256xf32> to vector<8x256xf32>
    %32 = arith.mulf %30, %31 : vector<8x256xf32>
    %33 = tpu.concatenate %14, %15, %18, %21, %22, %25, %28, %29, %32 in 0 : vector<8x256xf32>, vector<8x256xf32>, vector<8x256xf32>, vector<8x256xf32>, vector<8x256xf32>, vector<8x256xf32>, vector<8x256xf32>, vector<8x256xf32>, vector<8x256xf32> -> vector<72x256xf32>
    %34 = arith.truncf %33 : vector<72x256xf32> to vector<72x256xbf16>
    %cst_12 = arith.constant dense<0.000000e+00> : vector<8x256xf32>
    %35 = tpu.matmul %7, %34, %cst_12 {dimension_numbers = #tpu.dot_dimension_numbers<[1], [0], [0], [1], [0, 0, 1, 1], [], []>} : vector<8x72xbf16>, vector<72x256xbf16>, vector<8x256xf32> -> vector<8x256xf32>
    %36 = vector.broadcast %9 : vector<8x1xf32> to vector<8x256xf32>
    %37 = arith.addf %35, %36 : vector<8x256xf32>
    %cst_13 = arith.constant 0.000000e+00 : f32
    %38 = vector.broadcast %cst_13 : f32 to vector<8x256xf32>
    %39 = arith.maximumf %37, %38 : vector<8x256xf32>
    %c1_14 = arith.constant 1 : index
    %c0_15 = arith.constant 0 : index
    %c0_16 = arith.constant 0 : index
    %40 = vector.load %arg5[%c1_14, %c0_15, %c0_16] : memref<6x8x72xbf16, #tpu.memory_space<vmem>>, vector<1x8x72xbf16>
    %41 = vector.shape_cast %40 : vector<1x8x72xbf16> to vector<8x72xbf16>
    %c1_17 = arith.constant 1 : index
    %c0_18 = arith.constant 0 : index
    %c0_19 = arith.constant 0 : index
    %42 = vector.load %arg6[%c1_17, %c0_18, %c0_19] : memref<6x8x1xf32, #tpu.memory_space<vmem>>, vector<1x8x1xf32>
    %43 = vector.shape_cast %42 : vector<1x8x1xf32> to vector<8x1xf32>
    %cst_20 = arith.constant 0.000000e+00 : f32
    %44 = vector.broadcast %cst_20 : f32 to vector<8x17xf32>
    %45 = tpu.concatenate %44, %39, %44 in 1 : vector<8x17xf32>, vector<8x256xf32>, vector<8x17xf32> -> vector<8x290xf32>
    %46 = vector.extract_strided_slice %45 {offsets = [0, 0], sizes = [8, 256], strides = [1, 1]} : vector<8x290xf32> to vector<8x256xf32>
    %47 = vector.broadcast %0 : vector<1x256xf32> to vector<8x256xf32>
    %48 = arith.mulf %46, %47 : vector<8x256xf32>
    %49 = vector.extract_strided_slice %45 {offsets = [0, 1], sizes = [8, 256], strides = [1, 1]} : vector<8x290xf32> to vector<8x256xf32>
    %50 = vector.extract_strided_slice %45 {offsets = [0, 2], sizes = [8, 256], strides = [1, 1]} : vector<8x290xf32> to vector<8x256xf32>
    %51 = vector.broadcast %1 : vector<1x256xf32> to vector<8x256xf32>
    %52 = arith.mulf %50, %51 : vector<8x256xf32>
    %53 = vector.extract_strided_slice %45 {offsets = [0, 16], sizes = [8, 256], strides = [1, 1]} : vector<8x290xf32> to vector<8x256xf32>
    %54 = vector.broadcast %0 : vector<1x256xf32> to vector<8x256xf32>
    %55 = arith.mulf %53, %54 : vector<8x256xf32>
    %56 = vector.extract_strided_slice %45 {offsets = [0, 17], sizes = [8, 256], strides = [1, 1]} : vector<8x290xf32> to vector<8x256xf32>
    %57 = vector.extract_strided_slice %45 {offsets = [0, 18], sizes = [8, 256], strides = [1, 1]} : vector<8x290xf32> to vector<8x256xf32>
    %58 = vector.broadcast %1 : vector<1x256xf32> to vector<8x256xf32>
    %59 = arith.mulf %57, %58 : vector<8x256xf32>
    %60 = vector.extract_strided_slice %45 {offsets = [0, 32], sizes = [8, 256], strides = [1, 1]} : vector<8x290xf32> to vector<8x256xf32>
    %61 = vector.broadcast %0 : vector<1x256xf32> to vector<8x256xf32>
    %62 = arith.mulf %60, %61 : vector<8x256xf32>
    %63 = vector.extract_strided_slice %45 {offsets = [0, 33], sizes = [8, 256], strides = [1, 1]} : vector<8x290xf32> to vector<8x256xf32>
    %64 = vector.extract_strided_slice %45 {offsets = [0, 34], sizes = [8, 256], strides = [1, 1]} : vector<8x290xf32> to vector<8x256xf32>
    %65 = vector.broadcast %1 : vector<1x256xf32> to vector<8x256xf32>
    %66 = arith.mulf %64, %65 : vector<8x256xf32>
    %67 = tpu.concatenate %48, %49, %52, %55, %56, %59, %62, %63, %66 in 0 : vector<8x256xf32>, vector<8x256xf32>, vector<8x256xf32>, vector<8x256xf32>, vector<8x256xf32>, vector<8x256xf32>, vector<8x256xf32>, vector<8x256xf32>, vector<8x256xf32> -> vector<72x256xf32>
    %68 = arith.truncf %67 : vector<72x256xf32> to vector<72x256xbf16>
    %cst_21 = arith.constant dense<0.000000e+00> : vector<8x256xf32>
    %69 = tpu.matmul %41, %68, %cst_21 {dimension_numbers = #tpu.dot_dimension_numbers<[1], [0], [0], [1], [0, 0, 1, 1], [], []>} : vector<8x72xbf16>, vector<72x256xbf16>, vector<8x256xf32> -> vector<8x256xf32>
    %70 = vector.broadcast %43 : vector<8x1xf32> to vector<8x256xf32>
    %71 = arith.addf %69, %70 : vector<8x256xf32>
    %cst_22 = arith.constant 0.000000e+00 : f32
    %72 = vector.broadcast %cst_22 : f32 to vector<8x256xf32>
    %73 = arith.maximumf %71, %72 : vector<8x256xf32>
    %c2 = arith.constant 2 : index
    %c0_23 = arith.constant 0 : index
    %c0_24 = arith.constant 0 : index
    %74 = vector.load %arg5[%c2, %c0_23, %c0_24] : memref<6x8x72xbf16, #tpu.memory_space<vmem>>, vector<1x8x72xbf16>
    %75 = vector.shape_cast %74 : vector<1x8x72xbf16> to vector<8x72xbf16>
    %c2_25 = arith.constant 2 : index
    %c0_26 = arith.constant 0 : index
    %c0_27 = arith.constant 0 : index
    %76 = vector.load %arg6[%c2_25, %c0_26, %c0_27] : memref<6x8x1xf32, #tpu.memory_space<vmem>>, vector<1x8x1xf32>
    %77 = vector.shape_cast %76 : vector<1x8x1xf32> to vector<8x1xf32>
    %cst_28 = arith.constant 0.000000e+00 : f32
    %78 = vector.broadcast %cst_28 : f32 to vector<8x17xf32>
    %79 = tpu.concatenate %78, %73, %78 in 1 : vector<8x17xf32>, vector<8x256xf32>, vector<8x17xf32> -> vector<8x290xf32>
    %80 = vector.extract_strided_slice %79 {offsets = [0, 0], sizes = [8, 256], strides = [1, 1]} : vector<8x290xf32> to vector<8x256xf32>
    %81 = vector.broadcast %0 : vector<1x256xf32> to vector<8x256xf32>
    %82 = arith.mulf %80, %81 : vector<8x256xf32>
    %83 = vector.extract_strided_slice %79 {offsets = [0, 1], sizes = [8, 256], strides = [1, 1]} : vector<8x290xf32> to vector<8x256xf32>
    %84 = vector.extract_strided_slice %79 {offsets = [0, 2], sizes = [8, 256], strides = [1, 1]} : vector<8x290xf32> to vector<8x256xf32>
    %85 = vector.broadcast %1 : vector<1x256xf32> to vector<8x256xf32>
    %86 = arith.mulf %84, %85 : vector<8x256xf32>
    %87 = vector.extract_strided_slice %79 {offsets = [0, 16], sizes = [8, 256], strides = [1, 1]} : vector<8x290xf32> to vector<8x256xf32>
    %88 = vector.broadcast %0 : vector<1x256xf32> to vector<8x256xf32>
    %89 = arith.mulf %87, %88 : vector<8x256xf32>
    %90 = vector.extract_strided_slice %79 {offsets = [0, 17], sizes = [8, 256], strides = [1, 1]} : vector<8x290xf32> to vector<8x256xf32>
    %91 = vector.extract_strided_slice %79 {offsets = [0, 18], sizes = [8, 256], strides = [1, 1]} : vector<8x290xf32> to vector<8x256xf32>
    %92 = vector.broadcast %1 : vector<1x256xf32> to vector<8x256xf32>
    %93 = arith.mulf %91, %92 : vector<8x256xf32>
    %94 = vector.extract_strided_slice %79 {offsets = [0, 32], sizes = [8, 256], strides = [1, 1]} : vector<8x290xf32> to vector<8x256xf32>
    %95 = vector.broadcast %0 : vector<1x256xf32> to vector<8x256xf32>
    %96 = arith.mulf %94, %95 : vector<8x256xf32>
    %97 = vector.extract_strided_slice %79 {offsets = [0, 33], sizes = [8, 256], strides = [1, 1]} : vector<8x290xf32> to vector<8x256xf32>
    %98 = vector.extract_strided_slice %79 {offsets = [0, 34], sizes = [8, 256], strides = [1, 1]} : vector<8x290xf32> to vector<8x256xf32>
    %99 = vector.broadcast %1 : vector<1x256xf32> to vector<8x256xf32>
    %100 = arith.mulf %98, %99 : vector<8x256xf32>
    %101 = tpu.concatenate %82, %83, %86, %89, %90, %93, %96, %97, %100 in 0 : vector<8x256xf32>, vector<8x256xf32>, vector<8x256xf32>, vector<8x256xf32>, vector<8x256xf32>, vector<8x256xf32>, vector<8x256xf32>, vector<8x256xf32>, vector<8x256xf32> -> vector<72x256xf32>
    %102 = arith.truncf %101 : vector<72x256xf32> to vector<72x256xbf16>
    %cst_29 = arith.constant dense<0.000000e+00> : vector<8x256xf32>
    %103 = tpu.matmul %75, %102, %cst_29 {dimension_numbers = #tpu.dot_dimension_numbers<[1], [0], [0], [1], [0, 0, 1, 1], [], []>} : vector<8x72xbf16>, vector<72x256xbf16>, vector<8x256xf32> -> vector<8x256xf32>
    %104 = vector.broadcast %77 : vector<8x1xf32> to vector<8x256xf32>
    %105 = arith.addf %103, %104 : vector<8x256xf32>
    %c0_30 = arith.constant 0 : index
    %c0_31 = arith.constant 0 : index
    %c0_32 = arith.constant 0 : index
    %106 = vector.load %arg2[%c0_30, %c0_31, %c0_32] : memref<1x3x256xf32, #tpu.memory_space<vmem>>, vector<1x3x256xf32>
    %107 = vector.shape_cast %106 : vector<1x3x256xf32> to vector<3x256xf32>
    %108 = vector.extract_strided_slice %105 {offsets = [0, 0], sizes = [3, 256], strides = [1, 1]} : vector<8x256xf32> to vector<3x256xf32>
    %cst_33 = arith.constant 0.000000e+00 : f32
    %109 = vector.broadcast %cst_33 : f32 to vector<2x256xf32>
    %110 = tpu.concatenate %107, %108, %109 in 0 : vector<3x256xf32>, vector<3x256xf32>, vector<2x256xf32> -> vector<8x256xf32>
    %c3 = arith.constant 3 : index
    %c0_34 = arith.constant 0 : index
    %c0_35 = arith.constant 0 : index
    %111 = vector.load %arg5[%c3, %c0_34, %c0_35] : memref<6x8x72xbf16, #tpu.memory_space<vmem>>, vector<1x8x72xbf16>
    %112 = vector.shape_cast %111 : vector<1x8x72xbf16> to vector<8x72xbf16>
    %c3_36 = arith.constant 3 : index
    %c0_37 = arith.constant 0 : index
    %c0_38 = arith.constant 0 : index
    %113 = vector.load %arg6[%c3_36, %c0_37, %c0_38] : memref<6x8x1xf32, #tpu.memory_space<vmem>>, vector<1x8x1xf32>
    %114 = vector.shape_cast %113 : vector<1x8x1xf32> to vector<8x1xf32>
    %cst_39 = arith.constant 0.000000e+00 : f32
    %115 = vector.broadcast %cst_39 : f32 to vector<8x17xf32>
    %116 = tpu.concatenate %115, %110, %115 in 1 : vector<8x17xf32>, vector<8x256xf32>, vector<8x17xf32> -> vector<8x290xf32>
    %117 = vector.extract_strided_slice %116 {offsets = [0, 0], sizes = [8, 256], strides = [1, 1]} : vector<8x290xf32> to vector<8x256xf32>
    %118 = vector.broadcast %0 : vector<1x256xf32> to vector<8x256xf32>
    %119 = arith.mulf %117, %118 : vector<8x256xf32>
    %120 = vector.extract_strided_slice %116 {offsets = [0, 1], sizes = [8, 256], strides = [1, 1]} : vector<8x290xf32> to vector<8x256xf32>
    %121 = vector.extract_strided_slice %116 {offsets = [0, 2], sizes = [8, 256], strides = [1, 1]} : vector<8x290xf32> to vector<8x256xf32>
    %122 = vector.broadcast %1 : vector<1x256xf32> to vector<8x256xf32>
    %123 = arith.mulf %121, %122 : vector<8x256xf32>
    %124 = vector.extract_strided_slice %116 {offsets = [0, 16], sizes = [8, 256], strides = [1, 1]} : vector<8x290xf32> to vector<8x256xf32>
    %125 = vector.broadcast %0 : vector<1x256xf32> to vector<8x256xf32>
    %126 = arith.mulf %124, %125 : vector<8x256xf32>
    %127 = vector.extract_strided_slice %116 {offsets = [0, 17], sizes = [8, 256], strides = [1, 1]} : vector<8x290xf32> to vector<8x256xf32>
    %128 = vector.extract_strided_slice %116 {offsets = [0, 18], sizes = [8, 256], strides = [1, 1]} : vector<8x290xf32> to vector<8x256xf32>
    %129 = vector.broadcast %1 : vector<1x256xf32> to vector<8x256xf32>
    %130 = arith.mulf %128, %129 : vector<8x256xf32>
    %131 = vector.extract_strided_slice %116 {offsets = [0, 32], sizes = [8, 256], strides = [1, 1]} : vector<8x290xf32> to vector<8x256xf32>
    %132 = vector.broadcast %0 : vector<1x256xf32> to vector<8x256xf32>
    %133 = arith.mulf %131, %132 : vector<8x256xf32>
    %134 = vector.extract_strided_slice %116 {offsets = [0, 33], sizes = [8, 256], strides = [1, 1]} : vector<8x290xf32> to vector<8x256xf32>
    %135 = vector.extract_strided_slice %116 {offsets = [0, 34], sizes = [8, 256], strides = [1, 1]} : vector<8x290xf32> to vector<8x256xf32>
    %136 = vector.broadcast %1 : vector<1x256xf32> to vector<8x256xf32>
    %137 = arith.mulf %135, %136 : vector<8x256xf32>
    %138 = tpu.concatenate %119, %120, %123, %126, %127, %130, %133, %134, %137 in 0 : vector<8x256xf32>, vector<8x256xf32>, vector<8x256xf32>, vector<8x256xf32>, vector<8x256xf32>, vector<8x256xf32>, vector<8x256xf32>, vector<8x256xf32>, vector<8x256xf32> -> vector<72x256xf32>
    %139 = arith.truncf %138 : vector<72x256xf32> to vector<72x256xbf16>
    %cst_40 = arith.constant dense<0.000000e+00> : vector<8x256xf32>
    %140 = tpu.matmul %112, %139, %cst_40 {dimension_numbers = #tpu.dot_dimension_numbers<[1], [0], [0], [1], [0, 0, 1, 1], [], []>} : vector<8x72xbf16>, vector<72x256xbf16>, vector<8x256xf32> -> vector<8x256xf32>
    %141 = vector.broadcast %114 : vector<8x1xf32> to vector<8x256xf32>
    %142 = arith.addf %140, %141 : vector<8x256xf32>
    %cst_41 = arith.constant 0.000000e+00 : f32
    %143 = vector.broadcast %cst_41 : f32 to vector<8x256xf32>
    %144 = arith.maximumf %142, %143 : vector<8x256xf32>
    %c4 = arith.constant 4 : index
    %c0_42 = arith.constant 0 : index
    %c0_43 = arith.constant 0 : index
    %145 = vector.load %arg5[%c4, %c0_42, %c0_43] : memref<6x8x72xbf16, #tpu.memory_space<vmem>>, vector<1x8x72xbf16>
    %146 = vector.shape_cast %145 : vector<1x8x72xbf16> to vector<8x72xbf16>
    %c4_44 = arith.constant 4 : index
    %c0_45 = arith.constant 0 : index
    %c0_46 = arith.constant 0 : index
    %147 = vector.load %arg6[%c4_44, %c0_45, %c0_46] : memref<6x8x1xf32, #tpu.memory_space<vmem>>, vector<1x8x1xf32>
    %148 = vector.shape_cast %147 : vector<1x8x1xf32> to vector<8x1xf32>
    %cst_47 = arith.constant 0.000000e+00 : f32
    %149 = vector.broadcast %cst_47 : f32 to vector<8x17xf32>
    %150 = tpu.concatenate %149, %144, %149 in 1 : vector<8x17xf32>, vector<8x256xf32>, vector<8x17xf32> -> vector<8x290xf32>
    %151 = vector.extract_strided_slice %150 {offsets = [0, 0], sizes = [8, 256], strides = [1, 1]} : vector<8x290xf32> to vector<8x256xf32>
    %152 = vector.broadcast %0 : vector<1x256xf32> to vector<8x256xf32>
    %153 = arith.mulf %151, %152 : vector<8x256xf32>
    %154 = vector.extract_strided_slice %150 {offsets = [0, 1], sizes = [8, 256], strides = [1, 1]} : vector<8x290xf32> to vector<8x256xf32>
    %155 = vector.extract_strided_slice %150 {offsets = [0, 2], sizes = [8, 256], strides = [1, 1]} : vector<8x290xf32> to vector<8x256xf32>
    %156 = vector.broadcast %1 : vector<1x256xf32> to vector<8x256xf32>
    %157 = arith.mulf %155, %156 : vector<8x256xf32>
    %158 = vector.extract_strided_slice %150 {offsets = [0, 16], sizes = [8, 256], strides = [1, 1]} : vector<8x290xf32> to vector<8x256xf32>
    %159 = vector.broadcast %0 : vector<1x256xf32> to vector<8x256xf32>
    %160 = arith.mulf %158, %159 : vector<8x256xf32>
    %161 = vector.extract_strided_slice %150 {offsets = [0, 17], sizes = [8, 256], strides = [1, 1]} : vector<8x290xf32> to vector<8x256xf32>
    %162 = vector.extract_strided_slice %150 {offsets = [0, 18], sizes = [8, 256], strides = [1, 1]} : vector<8x290xf32> to vector<8x256xf32>
    %163 = vector.broadcast %1 : vector<1x256xf32> to vector<8x256xf32>
    %164 = arith.mulf %162, %163 : vector<8x256xf32>
    %165 = vector.extract_strided_slice %150 {offsets = [0, 32], sizes = [8, 256], strides = [1, 1]} : vector<8x290xf32> to vector<8x256xf32>
    %166 = vector.broadcast %0 : vector<1x256xf32> to vector<8x256xf32>
    %167 = arith.mulf %165, %166 : vector<8x256xf32>
    %168 = vector.extract_strided_slice %150 {offsets = [0, 33], sizes = [8, 256], strides = [1, 1]} : vector<8x290xf32> to vector<8x256xf32>
    %169 = vector.extract_strided_slice %150 {offsets = [0, 34], sizes = [8, 256], strides = [1, 1]} : vector<8x290xf32> to vector<8x256xf32>
    %170 = vector.broadcast %1 : vector<1x256xf32> to vector<8x256xf32>
    %171 = arith.mulf %169, %170 : vector<8x256xf32>
    %172 = tpu.concatenate %153, %154, %157, %160, %161, %164, %167, %168, %171 in 0 : vector<8x256xf32>, vector<8x256xf32>, vector<8x256xf32>, vector<8x256xf32>, vector<8x256xf32>, vector<8x256xf32>, vector<8x256xf32>, vector<8x256xf32>, vector<8x256xf32> -> vector<72x256xf32>
    %173 = arith.truncf %172 : vector<72x256xf32> to vector<72x256xbf16>
    %cst_48 = arith.constant dense<0.000000e+00> : vector<8x256xf32>
    %174 = tpu.matmul %146, %173, %cst_48 {dimension_numbers = #tpu.dot_dimension_numbers<[1], [0], [0], [1], [0, 0, 1, 1], [], []>} : vector<8x72xbf16>, vector<72x256xbf16>, vector<8x256xf32> -> vector<8x256xf32>
    %175 = vector.broadcast %148 : vector<8x1xf32> to vector<8x256xf32>
    %176 = arith.addf %174, %175 : vector<8x256xf32>
    %cst_49 = arith.constant 0.000000e+00 : f32
    %177 = vector.broadcast %cst_49 : f32 to vector<8x256xf32>
    %178 = arith.maximumf %176, %177 : vector<8x256xf32>
    %c5 = arith.constant 5 : index
    %c0_50 = arith.constant 0 : index
    %c0_51 = arith.constant 0 : index
    %179 = vector.load %arg5[%c5, %c0_50, %c0_51] : memref<6x8x72xbf16, #tpu.memory_space<vmem>>, vector<1x8x72xbf16>
    %180 = vector.shape_cast %179 : vector<1x8x72xbf16> to vector<8x72xbf16>
    %c5_52 = arith.constant 5 : index
    %c0_53 = arith.constant 0 : index
    %c0_54 = arith.constant 0 : index
    %181 = vector.load %arg6[%c5_52, %c0_53, %c0_54] : memref<6x8x1xf32, #tpu.memory_space<vmem>>, vector<1x8x1xf32>
    %182 = vector.shape_cast %181 : vector<1x8x1xf32> to vector<8x1xf32>
    %cst_55 = arith.constant 0.000000e+00 : f32
    %183 = vector.broadcast %cst_55 : f32 to vector<8x17xf32>
    %184 = tpu.concatenate %183, %178, %183 in 1 : vector<8x17xf32>, vector<8x256xf32>, vector<8x17xf32> -> vector<8x290xf32>
    %185 = vector.extract_strided_slice %184 {offsets = [0, 0], sizes = [8, 256], strides = [1, 1]} : vector<8x290xf32> to vector<8x256xf32>
    %186 = vector.broadcast %0 : vector<1x256xf32> to vector<8x256xf32>
    %187 = arith.mulf %185, %186 : vector<8x256xf32>
    %188 = vector.extract_strided_slice %184 {offsets = [0, 1], sizes = [8, 256], strides = [1, 1]} : vector<8x290xf32> to vector<8x256xf32>
    %189 = vector.extract_strided_slice %184 {offsets = [0, 2], sizes = [8, 256], strides = [1, 1]} : vector<8x290xf32> to vector<8x256xf32>
    %190 = vector.broadcast %1 : vector<1x256xf32> to vector<8x256xf32>
    %191 = arith.mulf %189, %190 : vector<8x256xf32>
    %192 = vector.extract_strided_slice %184 {offsets = [0, 16], sizes = [8, 256], strides = [1, 1]} : vector<8x290xf32> to vector<8x256xf32>
    %193 = vector.broadcast %0 : vector<1x256xf32> to vector<8x256xf32>
    %194 = arith.mulf %192, %193 : vector<8x256xf32>
    %195 = vector.extract_strided_slice %184 {offsets = [0, 17], sizes = [8, 256], strides = [1, 1]} : vector<8x290xf32> to vector<8x256xf32>
    %196 = vector.extract_strided_slice %184 {offsets = [0, 18], sizes = [8, 256], strides = [1, 1]} : vector<8x290xf32> to vector<8x256xf32>
    %197 = vector.broadcast %1 : vector<1x256xf32> to vector<8x256xf32>
    %198 = arith.mulf %196, %197 : vector<8x256xf32>
    %199 = vector.extract_strided_slice %184 {offsets = [0, 32], sizes = [8, 256], strides = [1, 1]} : vector<8x290xf32> to vector<8x256xf32>
    %200 = vector.broadcast %0 : vector<1x256xf32> to vector<8x256xf32>
    %201 = arith.mulf %199, %200 : vector<8x256xf32>
    %202 = vector.extract_strided_slice %184 {offsets = [0, 33], sizes = [8, 256], strides = [1, 1]} : vector<8x290xf32> to vector<8x256xf32>
    %203 = vector.extract_strided_slice %184 {offsets = [0, 34], sizes = [8, 256], strides = [1, 1]} : vector<8x290xf32> to vector<8x256xf32>
    %204 = vector.broadcast %1 : vector<1x256xf32> to vector<8x256xf32>
    %205 = arith.mulf %203, %204 : vector<8x256xf32>
    %206 = tpu.concatenate %187, %188, %191, %194, %195, %198, %201, %202, %205 in 0 : vector<8x256xf32>, vector<8x256xf32>, vector<8x256xf32>, vector<8x256xf32>, vector<8x256xf32>, vector<8x256xf32>, vector<8x256xf32>, vector<8x256xf32>, vector<8x256xf32> -> vector<72x256xf32>
    %207 = arith.truncf %206 : vector<72x256xf32> to vector<72x256xbf16>
    %cst_56 = arith.constant dense<0.000000e+00> : vector<8x256xf32>
    %208 = tpu.matmul %180, %207, %cst_56 {dimension_numbers = #tpu.dot_dimension_numbers<[1], [0], [0], [1], [0, 0, 1, 1], [], []>} : vector<8x72xbf16>, vector<72x256xbf16>, vector<8x256xf32> -> vector<8x256xf32>
    %209 = vector.broadcast %182 : vector<8x1xf32> to vector<8x256xf32>
    %210 = arith.addf %208, %209 : vector<8x256xf32>
    %211 = vector.extract_strided_slice %210 {offsets = [0, 0], sizes = [3, 256], strides = [1, 1]} : vector<8x256xf32> to vector<3x256xf32>
    %c0_57 = arith.constant 0 : index
    %c0_58 = arith.constant 0 : index
    %c0_59 = arith.constant 0 : index
    %212 = vector.load %arg1[%c0_57, %c0_58, %c0_59] : memref<1x1x256xf32, #tpu.memory_space<vmem>>, vector<1x1x256xf32>
    %213 = vector.shape_cast %212 : vector<1x1x256xf32> to vector<1x256xf32>
    %cst_60 = arith.constant 1.000000e+00 : f32
    %214 = vector.broadcast %cst_60 : f32 to vector<1x256xf32>
    %215 = arith.subf %214, %213 : vector<1x256xf32>
    %216 = vector.broadcast %215 : vector<1x256xf32> to vector<3x256xf32>
    %217 = arith.mulf %211, %216 : vector<3x256xf32>
    %c0_61 = arith.constant 0 : index
    %c0_62 = arith.constant 0 : index
    %c0_63 = arith.constant 0 : index
    %218 = vector.load %arg7[%c0_61, %c0_62, %c0_63] : memref<1x3x256xf32, #tpu.memory_space<vmem>>, vector<1x3x256xf32>
    %219 = vector.shape_cast %218 : vector<1x3x256xf32> to vector<3x256xf32>
    %220 = vector.shape_cast %217 : vector<3x256xf32> to vector<1x3x256xf32>
    tpu.vector_store %arg7[%c0_61, %c0_62, %c0_63], %220 {strides = array<i32>} : memref<1x3x256xf32, #tpu.memory_space<vmem>>, vector<1x3x256xf32>,
    %221 = vector.broadcast %213 : vector<1x256xf32> to vector<3x256xf32>
    %222 = arith.mulf %211, %221 : vector<3x256xf32>
    %c0_64 = arith.constant 0 : index
    %c0_65 = arith.constant 0 : index
    %c0_66 = arith.constant 0 : index
    %223 = vector.load %arg8[%c0_64, %c0_65, %c0_66] : memref<1x3x256xf32, #tpu.memory_space<vmem>>, vector<1x3x256xf32>
    %224 = vector.shape_cast %223 : vector<1x3x256xf32> to vector<3x256xf32>
    %225 = vector.shape_cast %222 : vector<3x256xf32> to vector<1x3x256xf32>
    tpu.vector_store %arg8[%c0_64, %c0_65, %c0_66], %225 {strides = array<i32>} : memref<1x3x256xf32, #tpu.memory_space<vmem>>, vector<1x3x256xf32>,
    return
  }
  func.func @transform_0(%arg0: i32) -> (i32, i32, i32) {
    %c0_i32 = arith.constant 0 : i32
    %c0_i32_0 = arith.constant 0 : i32
    %c0_i32_1 = arith.constant 0 : i32
    return %arg0, %c0_i32, %c0_i32_0 : i32, i32, i32
  }
  func.func @transform_1(%arg0: i32) -> (i32, i32, i32) {
    %c0_i32 = arith.constant 0 : i32
    %c0_i32_0 = arith.constant 0 : i32
    %c0_i32_1 = arith.constant 0 : i32
    return %arg0, %c0_i32, %c0_i32_0 : i32, i32, i32
  }
  func.func @transform_2(%arg0: i32) -> (i32, i32, i32) {
    %c0_i32 = arith.constant 0 : i32
    %c0_i32_0 = arith.constant 0 : i32
    %c0_i32_1 = arith.constant 0 : i32
    return %arg0, %c0_i32, %c0_i32_0 : i32, i32, i32
  }
  func.func @transform_3(%arg0: i32) -> (i32, i32) {
    %c0_i32 = arith.constant 0 : i32
    %c0_i32_0 = arith.constant 0 : i32
    %c0_i32_1 = arith.constant 0 : i32
    return %c0_i32, %c0_i32_0 : i32, i32
  }
  func.func @transform_4(%arg0: i32) -> (i32, i32, i32) {
    %c0_i32 = arith.constant 0 : i32
    %c0_i32_0 = arith.constant 0 : i32
    %c0_i32_1 = arith.constant 0 : i32
    %c0_i32_2 = arith.constant 0 : i32
    return %c0_i32, %c0_i32_0, %c0_i32_1 : i32, i32, i32
  }
  func.func @transform_5(%arg0: i32) -> (i32, i32, i32) {
    %c0_i32 = arith.constant 0 : i32
    %c0_i32_0 = arith.constant 0 : i32
    %c0_i32_1 = arith.constant 0 : i32
    %c0_i32_2 = arith.constant 0 : i32
    return %c0_i32, %c0_i32_0, %c0_i32_1 : i32, i32, i32
  }
  func.func @transform_6(%arg0: i32) -> (i32, i32, i32) {
    %c0_i32 = arith.constant 0 : i32
    %c0_i32_0 = arith.constant 0 : i32
    %c0_i32_1 = arith.constant 0 : i32
    return %arg0, %c0_i32, %c0_i32_0 : i32, i32, i32
  }
  func.func @transform_7(%arg0: i32) -> (i32, i32, i32) {
    %c0_i32 = arith.constant 0 : i32
    %c0_i32_0 = arith.constant 0 : i32
    %c0_i32_1 = arith.constant 0 : i32
    return %arg0, %c0_i32, %c0_i32_0 : i32, i32, i32
  }
}

</mosaic_0001>

<llo_original>
// kernel: fused_encode.1
$region0: #{fused_encode.1}
  #allocation0 [shape = 'u32[]', space=smem, size = 0x4, offset = 0x4, fixed_abs, tag = 'smem constant byte address 0x4 - core index']
  #allocation1 [shape = 'u32[144,128]{1,0:T(1,128)}', space=vmem, size = 0x12000, scoped, tag = 'internal scratch']
  %s0 = inlined_call_operand.vmem [shape: f32[2,1,256], index: 0, kind: input, shape index: {}]
  %s1 = inlined_call_operand.vmem [shape: f32[2,3,256], index: 1, kind: input, shape index: {}]
  %s2 = inlined_call_operand.vmem [shape: f32[2,3,256], index: 2, kind: input, shape index: {}]
  %s3 = inlined_call_operand.vmem [shape: f32[2,256], index: 3, kind: input, shape index: {}]
  %s4 = inlined_call_operand.vmem [shape: bf16[6,8,72], index: 4, kind: input, shape index: {}]
  %s5 = inlined_call_operand.vmem [shape: f32[6,8,1], index: 5, kind: input, shape index: {}]
  %s6 = inlined_call_operand.vmem [shape: f32[2,3,256], index: 6, kind: output, shape index: {0}]
  %s7 = inlined_call_operand.vmem [shape: f32[2,3,256], index: 7, kind: output, shape index: {1}]
  %8 = xla_tuple %s6, %s7
  %s9 = sld [smem:[#allocation0]]
  $region65: #{fused_encode.1} parent=0
    _
  %s11 = ssub.s32 1, %s9
  %s12 = scalar_select 0, %s11, %s9
  loop: start=0, step=1, limit=4
  $region2: #{fused_encode.1} parent=0 // loop_pre_header
    _
  $region3: #{fused_encode.1} parent=0 // loop_header
    %s14 = sphi 0, %s18
    %p15 = scmp.ge.s32.totalorder %s14, 4
    %s24 = sphi 0, %s26
    %s27 = sphi 0, %s24
    %s28 = sphi 0, %s27
    %s44 = sphi 0, %s28
    %s50 = sphi 0, %s52
    %s53 = sphi 0, %s50
    %s54 = sphi 0, %s53
    %s70 = sphi 0, %s54
    %s76 = sphi 0, %s78
    %s79 = sphi 0, %s76
    %s80 = sphi 0, %s79
    %s96 = sphi 0, %s80
    %s100 = sphi 0, %s100
    %s102 = sphi 0, %s100
    %s103 = sphi 0, %s102
    %s117 = sphi 0, %s103
    %s121 = sphi 0, %s121
    %s123 = sphi 0, %s121
    %s124 = sphi 0, %s123
    %s138 = sphi 0, %s124
    %s142 = sphi 0, %s142
    %s144 = sphi 0, %s142
    %s145 = sphi 0, %s144
    %s159 = sphi 0, %s145
    %s165 = sphi 0, %s167
    %s168 = sphi 0, %s165
    %s169 = sphi 0, %s168
    %s185 = sphi 0, %s169
    %s191 = sphi 0, %s193
    %s194 = sphi 0, %s191
    %s195 = sphi 0, %s194
    %s211 = sphi 0, %s195
  $region4: #{fused_encode.1} parent=0 // loop_header_branch
    %17 = sbr.rel (%p15) target = $region8
  $region5: #{fused_encode.1} parent=0 // loop_body
    %s19 = ssub.s32 %s14, 1
    %s20 = ssub.s32 %s14, 2
    %s21 = sadd.s32 %s14, 1
    %s22 = ssub.s32 %s14, %s21
    %p23 = scmp.eq.s32.totalorder %s22, 0
    %s25 = sadd.s32 %s24, 1
    %s26 = scalar_select %p23, %s24, %s25
    %p29 = pneg %p23
    %p30 = scmp.eq.s32.totalorder %s14, 1
    %p31 = por %p29, %p30
    %p32 = scmp.ne.s32.totalorder %s24, %s27
    %p33 = scmp.eq.s32.totalorder %s14, 0
    %p34 = por %p32, %p33
    %p35 = scmp.ne.s32.totalorder %s24, %s27
    %p36 = scmp.eq.s32.totalorder %s19, 1
    %p37 = por %p35, %p36
    %p38 = scmp.ne.s32.totalorder %s27, %s28
    %p39 = scmp.eq.s32.totalorder %s19, 0
    %p40 = por %p38, %p39
    %p41 = scmp.ne.s32.totalorder %s27, %s28
    %p42 = scmp.eq.s32.totalorder %s20, 1
    %p43 = por %p41, %p42
    %p45 = scmp.ne.s32.totalorder %s28, %s44
    %p46 = scmp.eq.s32.totalorder %s20, 0
    %p47 = por %p45, %p46
    %s48 = ssub.s32 %s14, %s21
    %p49 = scmp.eq.s32.totalorder %s48, 0
    %s51 = sadd.s32 %s50, 1
    %s52 = scalar_select %p49, %s50, %s51
    %p55 = pneg %p49
    %p56 = scmp.eq.s32.totalorder %s14, 1
    %p57 = por %p55, %p56
    %p58 = scmp.ne.s32.totalorder %s50, %s53
    %p59 = scmp.eq.s32.totalorder %s14, 0
    %p60 = por %p58, %p59
    %p61 = scmp.ne.s32.totalorder %s50, %s53
    %p62 = scmp.eq.s32.totalorder %s19, 1
    %p63 = por %p61, %p62
    %p64 = scmp.ne.s32.totalorder %s53, %s54
    %p65 = scmp.eq.s32.totalorder %s19, 0
    %p66 = por %p64, %p65
    %p67 = scmp.ne.s32.totalorder %s53, %s54
    %p68 = scmp.eq.s32.totalorder %s20, 1
    %p69 = por %p67, %p68
    %p71 = scmp.ne.s32.totalorder %s54, %s70
    %p72 = scmp.eq.s32.totalorder %s20, 0
    %p73 = por %p71, %p72
    %s74 = ssub.s32 %s14, %s21
    %p75 = scmp.eq.s32.totalorder %s74, 0
    %s77 = sadd.s32 %s76, 1
    %s78 = scalar_select %p75, %s76, %s77
    %p81 = pneg %p75
    %p82 = scmp.eq.s32.totalorder %s14, 1
    %p83 = por %p81, %p82
    %p84 = scmp.ne.s32.totalorder %s76, %s79
    %p85 = scmp.eq.s32.totalorder %s14, 0
    %p86 = por %p84, %p85
    %p87 = scmp.ne.s32.totalorder %s76, %s79
    %p88 = scmp.eq.s32.totalorder %s19, 1
    %p89 = por %p87, %p88
    %p90 = scmp.ne.s32.totalorder %s79, %s80
    %p91 = scmp.eq.s32.totalorder %s19, 0
    %p92 = por %p90, %p91
    %p93 = scmp.ne.s32.totalorder %s79, %s80
    %p94 = scmp.eq.s32.totalorder %s20, 1
    %p95 = por %p93, %p94
    %p97 = scmp.ne.s32.totalorder %s80, %s96
    %p98 = scmp.eq.s32.totalorder %s20, 0
    %p99 = por %p97, %p98
    %s101 = sadd.s32 %s100, 1
    %p104 = scmp.eq.s32.totalorder %s14, 1
    %p105 = scmp.ne.s32.totalorder %s100, %s102
    %p106 = scmp.eq.s32.totalorder %s14, 0
    %p107 = por %p105, %p106
    %p108 = scmp.ne.s32.totalorder %s100, %s102
    %p109 = scmp.eq.s32.totalorder %s19, 1
    %p110 = por %p108, %p109
    %p111 = scmp.ne.s32.totalorder %s102, %s103
    %p112 = scmp.eq.s32.totalorder %s19, 0
    %p113 = por %p111, %p112
    %p114 = scmp.ne.s32.totalorder %s102, %s103
    %p115 = scmp.eq.s32.totalorder %s20, 1
    %p116 = por %p114, %p115
    %p118 = scmp.ne.s32.totalorder %s103, %s117
    %p119 = scmp.eq.s32.totalorder %s20, 0
    %p120 = por %p118, %p119
    %s122 = sadd.s32 %s121, 1
    %p125 = scmp.eq.s32.totalorder %s14, 1
    %p126 = scmp.ne.s32.totalorder %s121, %s123
    %p127 = scmp.eq.s32.totalorder %s14, 0
    %p128 = por %p126, %p127
    %p129 = scmp.ne.s32.totalorder %s121, %s123
    %p130 = scmp.eq.s32.totalorder %s19, 1
    %p131 = por %p129, %p130
    %p132 = scmp.ne.s32.totalorder %s123, %s124
    %p133 = scmp.eq.s32.totalorder %s19, 0
    %p134 = por %p132, %p133
    %p135 = scmp.ne.s32.totalorder %s123, %s124
    %p136 = scmp.eq.s32.totalorder %s20, 1
    %p137 = por %p135, %p136
    %p139 = scmp.ne.s32.totalorder %s124, %s138
    %p140 = scmp.eq.s32.totalorder %s20, 0
    %p141 = por %p139, %p140
    %s143 = sadd.s32 %s142, 1
    %p146 = scmp.eq.s32.totalorder %s14, 1
    %p147 = scmp.ne.s32.totalorder %s142, %s144
    %p148 = scmp.eq.s32.totalorder %s14, 0
    %p149 = por %p147, %p148
    %p150 = scmp.ne.s32.totalorder %s142, %s144
    %p151 = scmp.eq.s32.totalorder %s19, 1
    %p152 = por %p150, %p151
    %p153 = scmp.ne.s32.totalorder %s144, %s145
    %p154 = scmp.eq.s32.totalorder %s19, 0
    %p155 = por %p153, %p154
    %p156 = scmp.ne.s32.totalorder %s144, %s145
    %p157 = scmp.eq.s32.totalorder %s20, 1
    %p158 = por %p156, %p157
    %p160 = scmp.ne.s32.totalorder %s145, %s159
    %p161 = scmp.eq.s32.totalorder %s20, 0
    %p162 = por %p160, %p161
    %s163 = ssub.s32 %s14, %s21
    %p164 = scmp.eq.s32.totalorder %s163, 0
    %s166 = sadd.s32 %s165, 1
    %s167 = scalar_select %p164, %s165, %s166
    %p170 = pneg %p164
    %p171 = scmp.eq.s32.totalorder %s14, 1
    %p172 = por %p170, %p171
    %p173 = scmp.ne.s32.totalorder %s165, %s168
    %p174 = scmp.eq.s32.totalorder %s14, 0
    %p175 = por %p173, %p174
    %p176 = scmp.ne.s32.totalorder %s165, %s168
    %p177 = scmp.eq.s32.totalorder %s19, 1
    %p178 = por %p176, %p177
    %p179 = scmp.ne.s32.totalorder %s168, %s169
    %p180 = scmp.eq.s32.totalorder %s19, 0
    %p181 = por %p179, %p180
    %p182 = scmp.ne.s32.totalorder %s168, %s169
    %p183 = scmp.eq.s32.totalorder %s20, 1
    %p184 = por %p182, %p183
    %p186 = scmp.ne.s32.totalorder %s169, %s185
    %p187 = scmp.eq.s32.totalorder %s20, 0
    %p188 = por %p186, %p187
    %s189 = ssub.s32 %s14, %s21
    %p190 = scmp.eq.s32.totalorder %s189, 0
    %s192 = sadd.s32 %s191, 1
    %s193 = scalar_select %p190, %s191, %s192
    %p196 = pneg %p190
    %p197 = scmp.eq.s32.totalorder %s14, 1
    %p198 = por %p196, %p197
    %p199 = scmp.ne.s32.totalorder %s191, %s194
    %p200 = scmp.eq.s32.totalorder %s14, 0
    %p201 = por %p199, %p200
    %p202 = scmp.ne.s32.totalorder %s191, %s194
    %p203 = scmp.eq.s32.totalorder %s19, 1
    %p204 = por %p202, %p203
    %p205 = scmp.ne.s32.totalorder %s194, %s195
    %p206 = scmp.eq.s32.totalorder %s19, 0
    %p207 = por %p205, %p206
    %p208 = scmp.ne.s32.totalorder %s194, %s195
    %p209 = scmp.eq.s32.totalorder %s20, 1
    %p210 = por %p208, %p209
    %p212 = scmp.ne.s32.totalorder %s195, %s211
    %p213 = scmp.eq.s32.totalorder %s20, 0
    %p214 = por %p212, %p213
    %p215 = scmp.le.s32.totalorder 1, %s14
    %p216 = scmp.lt.s32.totalorder %s14, 3
    %p217 = pnand %p215, %p216
    %p218 = pneg %p217
    // Predicated region
    $region9: #{fused_encode.1} parent=5 // pred_check
      _
    $region10: #{fused_encode.1} parent=5 // pred_check_branch
      %220 = sbr.rel (%p217) target = $region12
    $region11: #{fused_encode.1} parent=5 // pred_region
      %s221 = ssub.s32 %s14, 1
      // Predicated region
      $region13: #{fused_encode.1} parent=11 // pred_check
        %p222 = pneg %p113
      $region14: #{fused_encode.1} parent=11 // pred_check_branch
        %224 = sbr.rel (%p222) target = $region16
      $region15: #{fused_encode.1} parent=11 // pred_region
        _
      $region16: #{fused_encode.1} parent=11 // pred_fallthru
        _
      // Predicated region
      $region17: #{fused_encode.1} parent=11 // pred_check
        %p225 = pneg %p134
      $region18: #{fused_encode.1} parent=11 // pred_check_branch
        %227 = sbr.rel (%p225) target = $region20
      $region19: #{fused_encode.1} parent=11 // pred_region
        _
      $region20: #{fused_encode.1} parent=11 // pred_fallthru
        _
      // Predicated region
      $region21: #{fused_encode.1} parent=11 // pred_check
        %p228 = pneg %p155
      $region22: #{fused_encode.1} parent=11 // pred_check_branch
        %230 = sbr.rel (%p228) target = $region24
      $region23: #{fused_encode.1} parent=11 // pred_region
        _
      $region24: #{fused_encode.1} parent=11 // pred_fallthru
        _
    $region12: #{fused_encode.1} parent=5 // pred_fallthru
      _
    %p231 = scmp.lt.s32.totalorder %s14, 2
    // Predicated region
    $region25: #{fused_encode.1} parent=5 // pred_check
      %p232 = pneg %p231
    $region26: #{fused_encode.1} parent=5 // pred_check_branch
      %234 = sbr.rel (%p232) target = $region28
    $region27: #{fused_encode.1} parent=5 // pred_region
      // Predicated region
      $region29: #{fused_encode.1} parent=27 // pred_check
        %p235 = pneg %p34
      $region30: #{fused_encode.1} parent=27 // pred_check_branch
        %237 = sbr.rel (%p235) target = $region32
      $region31: #{fused_encode.1} parent=27 // pred_region
        %p238 = scmp.lt.s32.totalorder %s14, 1
        %s239 = scalar_select %p238, %s14, 1
        %s240 = smul.addr %s239, 2
        %s241 = scalar_lea.vmem %s0, %s240
      $region32: #{fused_encode.1} parent=27 // pred_fallthru
        _
      // Predicated region
      $region33: #{fused_encode.1} parent=27 // pred_check
        %p242 = pneg %p60
      $region34: #{fused_encode.1} parent=27 // pred_check_branch
        %244 = sbr.rel (%p242) target = $region36
      $region35: #{fused_encode.1} parent=27 // pred_region
        %p245 = scmp.lt.s32.totalorder %s14, 1
        %s246 = scalar_select %p245, %s14, 1
        %s247 = smul.addr %s246, 2
        %s248 = smul.addr %s247, 4
        %s249 = scalar_lea.vmem %s1, %s248
      $region36: #{fused_encode.1} parent=27 // pred_fallthru
        _
      // Predicated region
      $region37: #{fused_encode.1} parent=27 // pred_check
        %p250 = pneg %p86
      $region38: #{fused_encode.1} parent=27 // pred_check_branch
        %252 = sbr.rel (%p250) target = $region40
      $region39: #{fused_encode.1} parent=27 // pred_region
        %p253 = scmp.lt.s32.totalorder %s14, 1
        %s254 = scalar_select %p253, %s14, 1
        %s255 = smul.addr %s254, 2
        %s256 = smul.addr %s255, 4
        %s257 = scalar_lea.vmem %s2, %s256
      $region40: #{fused_encode.1} parent=27 // pred_fallthru
        _
    $region28: #{fused_encode.1} parent=5 // pred_fallthru
      _
    %p258 = scmp.le.s32.totalorder 1, %s14
    %p259 = scmp.lt.s32.totalorder %s14, 3
    %p260 = pnand %p258, %p259
    %p261 = pneg %p260
    // Predicated region
    $region41: #{fused_encode.1} parent=5 // pred_check
      _
    $region42: #{fused_encode.1} parent=5 // pred_check_branch
      %263 = sbr.rel (%p260) target = $region44
    $region43: #{fused_encode.1} parent=5 // pred_region
      %s264 = ssub.s32 %s14, 1
      %p265 = scmp.lt.s32.totalorder %s19, 1
      %s266 = scalar_select %p265, %s19, 1
      %s267 = smul.addr %s266, 2
      %s268 = scalar_lea.vmem %s0, %s267
      %p269 = pneg %p40
      %p270 = pneg %p37
      %p271 = scmp.lt.s32.totalorder %s19, 1
      %s272 = scalar_select %p271, %s19, 1
      %s273 = smul.addr %s272, 2
      %s274 = smul.addr %s273, 4
      %s275 = scalar_lea.vmem %s1, %s274
      %p276 = pneg %p66
      %p277 = pneg %p63
      %p278 = scmp.lt.s32.totalorder %s19, 1
      %s279 = scalar_select %p278, %s19, 1
      %s280 = smul.addr %s279, 2
      %s281 = smul.addr %s280, 4
      %s282 = scalar_lea.vmem %s2, %s281
      %p283 = pneg %p92
      %p284 = pneg %p89
      %p285 = pneg %p113
      %p286 = pneg %p110
      %p287 = pneg %p134
      %p288 = pneg %p131
      %p289 = pneg %p155
      %p290 = pneg %p152
      %p291 = pneg %p181
      %p292 = pneg %p178
      %p293 = scmp.lt.s32.totalorder %s19, 1
      %s294 = scalar_select %p293, %s19, 1
      %s295 = smul.addr %s294, 2
      %s296 = smul.addr %s295, 4
      %s297 = scalar_lea.vmem %s6, %s296
      %p298 = pneg %p207
      %p299 = pneg %p204
      %p300 = scmp.lt.s32.totalorder %s19, 1
      %s301 = scalar_select %p300, %s19, 1
      %s302 = smul.addr %s301, 2
      %s303 = smul.addr %s302, 4
      %s304 = scalar_lea.vmem %s7, %s303
      %p305 = scmp.lt.s32.totalorder %s19, 1
      %s306 = scalar_select %p305, %s19, 1
      %s307 = smul.addr %s306, 2
      %s308 = scalar_lea.vmem %s0, %s307
      %p309 = scmp.lt.s32.totalorder %s19, 1
      %s310 = scalar_select %p309, %s19, 1
      %s311 = smul.addr %s310, 2
      %s312 = smul.addr %s311, 4
      %s313 = scalar_lea.vmem %s1, %s312
      %p314 = scmp.lt.s32.totalorder %s19, 1
      %s315 = scalar_select %p314, %s19, 1
      %s316 = smul.addr %s315, 2
      %s317 = smul.addr %s316, 4
      %s318 = scalar_lea.vmem %s2, %s317
      %p319 = scmp.lt.s32.totalorder %s19, 1
      %s320 = scalar_select %p319, %s19, 1
      %s321 = smul.addr %s320, 2
      %s322 = smul.addr %s321, 4
      %s323 = scalar_lea.vmem %s6, %s322
      %p324 = scmp.lt.s32.totalorder %s19, 1
      %s325 = scalar_select %p324, %s19, 1
      %s326 = smul.addr %s325, 2
      %s327 = smul.addr %s326, 4
      %s328 = scalar_lea.vmem %s7, %s327
      %v330 = vld [vmem:[%s3] ss:$2 sm:$0x3]
      %s331 = scalar_lea.vmem %s3, 1
      %v332 = vld [vmem:[%s331] ss:$2 sm:$0x3]
      %v333 = vld [vmem:[%s318] sm:$0x77]
      %v335 = vcombine.high %v333, %v333
      %vm337 = vcmask 1042432
      %v338 = vsel %vm337, %v333, 0.0
      %v339 = vsel %vm337, %v335, 0.0
      %v340 = vld [vmem:[%s4] sm:$0xf]
      %v341 = vld [vmem:[%s5] sm:$0xff]
      %344 = vrot.lane.b32.xlu0 %v338, 17
      %v345 = vpop.permute.xlu0 %344
      %346 = vrot.lane.b32.xlu0 %v339, 17
      %v347 = vpop.permute.xlu0 %346
      %vm348 = vcmask 138240
      %v349 = vsel %vm348, %v345, %v347
      %v353 = vsel %vm348, 0.0, %v345
      %v354 = vsel %vm348, %v347, 0.0
      %v356 = vlaneseq
      %v357 = vshrl.u32 %v356, 7
      %v358 = vsub.s32 0, %v357
      %v359 = vrot.slane %v330, %v358
      %v360 = vlaneseq
      %v361 = vshrl.u32 %v360, 7
      %v362 = vsub.s32 1, %v361
      %v363 = vrot.slane %v330, %v362
      %v366 = vmul.f32 %v353, %v359
      %v367 = vmul.f32 %v349, %v363
      %v369 = vlaneseq
      %v370 = vshrl.u32 %v369, 7
      %v371 = vsub.s32 0, %v370
      %v372 = vrot.slane %v332, %v371
      %v373 = vlaneseq
      %v374 = vshrl.u32 %v373, 7
      %v375 = vsub.s32 1, %v374
      %v376 = vrot.slane %v332, %v375
      %377 = vrot.lane.b32.xlu0 %v372, 2
      %v378 = vpop.permute.xlu0 %377
      %379 = vrot.lane.b32.xlu0 %v376, 2
      %v380 = vpop.permute.xlu0 %379
      %vm381 = vcmask 15360
      %v382 = vsel %vm381, %v378, %v380
      %v386 = vmul.f32 %v353, %v378
      %v387 = vmul.f32 %v349, %v382
      %v388 = vmul.f32 %v354, %v380
      %389 = vrot.lane.b32.xlu0 %v359, 16
      %v390 = vpop.permute.xlu0 %389
      %391 = vrot.lane.b32.xlu0 %v363, 16
      %v392 = vpop.permute.xlu0 %391
      %vm393 = vcmask 130048
      %v394 = vsel %vm393, %v390, %v392
      %v398 = vmul.f32 %v353, %v390
      %v399 = vmul.f32 %v349, %v394
      %v400 = vmul.f32 %v354, %v392
      %401 = vrot.lane.b32.xlu0 %v372, 18
      %v402 = vpop.permute.xlu0 %401
      %403 = vrot.lane.b32.xlu0 %v376, 18
      %v404 = vpop.permute.xlu0 %403
      %vm405 = vcmask 146432
      %v406 = vsel %vm405, %v402, %v404
      %v410 = vmul.f32 %v353, %v402
      %v411 = vmul.f32 %v349, %v406
      %v412 = vmul.f32 %v354, %v404
      %413 = vrot.lane.b32.xlu0 %v359, 32
      %v414 = vpop.permute.xlu0 %413
      %415 = vrot.lane.b32.xlu0 %v363, 32
      %v416 = vpop.permute.xlu0 %415
      %vm417 = vcmask 261120
      %v418 = vsel %vm417, %v414, %v416
      %v422 = vmul.f32 %v353, %v414
      %v423 = vmul.f32 %v349, %v418
      %v424 = vmul.f32 %v354, %v416
      %425 = vrot.lane.b32.xlu0 %v372, 34
      %v426 = vpop.permute.xlu0 %425
      %427 = vrot.lane.b32.xlu0 %v376, 34
      %v428 = vpop.permute.xlu0 %427
      %vm429 = vcmask 277504
      %v430 = vsel %vm429, %v426, %v428
      %v434 = vmul.f32 %v353, %v426
      %v435 = vmul.f32 %v349, %v430
      %v436 = vmul.f32 %v354, %v428
      %439 = vrot.lane.b32.xlu0 %v353, 127
      %v440 = vpop.permute.xlu0 %439
      %441 = vrot.lane.b32.xlu0 %v349, 127
      %v442 = vpop.permute.xlu0 %441
      %443 = vrot.lane.b32.xlu0 %v354, 127
      %v444 = vpop.permute.xlu0 %443
      %vm445 = vcmask 1039360
      %v446 = vsel %vm445, %v440, %v442
      %v447 = vsel %vm445, %v442, %v444
      %453 = vrot.lane.b32.xlu0 %v386, 126
      %v454 = vpop.permute.xlu0 %453
      %455 = vrot.lane.b32.xlu0 %v387, 126
      %v456 = vpop.permute.xlu0 %455
      %457 = vrot.lane.b32.xlu0 %v388, 126
      %v458 = vpop.permute.xlu0 %457
      %vm459 = vcmask 1031168
      %v460 = vsel %vm459, %v454, %v456
      %v461 = vsel %vm459, %v456, %v458
      %467 = vrot.lane.b32.xlu0 %v398, 112
      %v468 = vpop.permute.xlu0 %467
      %469 = vrot.lane.b32.xlu0 %v399, 112
      %v470 = vpop.permute.xlu0 %469
      %471 = vrot.lane.b32.xlu0 %v400, 112
      %v472 = vpop.permute.xlu0 %471
      %vm473 = vcmask 916480
      %v474 = vsel %vm473, %v468, %v470
      %v475 = vsel %vm473, %v470, %v472
      %478 = vrot.lane.b32.xlu0 %v353, 111
      %v479 = vpop.permute.xlu0 %478
      %480 = vrot.lane.b32.xlu0 %v349, 111
      %v481 = vpop.permute.xlu0 %480
      %482 = vrot.lane.b32.xlu0 %v354, 111
      %v483 = vpop.permute.xlu0 %482
      %vm484 = vcmask 908288
      %v485 = vsel %vm484, %v479, %v481
      %v486 = vsel %vm484, %v481, %v483
      %492 = vrot.lane.b32.xlu0 %v410, 110
      %v493 = vpop.permute.xlu0 %492
      %494 = vrot.lane.b32.xlu0 %v411, 110
      %v495 = vpop.permute.xlu0 %494
      %496 = vrot.lane.b32.xlu0 %v412, 110
      %v497 = vpop.permute.xlu0 %496
      %vm498 = vcmask 900096
      %v499 = vsel %vm498, %v493, %v495
      %v500 = vsel %vm498, %v495, %v497
      %506 = vrot.lane.b32.xlu0 %v422, 96
      %v507 = vpop.permute.xlu0 %506
      %508 = vrot.lane.b32.xlu0 %v423, 96
      %v509 = vpop.permute.xlu0 %508
      %510 = vrot.lane.b32.xlu0 %v424, 96
      %v511 = vpop.permute.xlu0 %510
      %vm512 = vcmask 785408
      %v513 = vsel %vm512, %v507, %v509
      %v514 = vsel %vm512, %v509, %v511
      %517 = vrot.lane.b32.xlu0 %v353, 95
      %v518 = vpop.permute.xlu0 %517
      %519 = vrot.lane.b32.xlu0 %v349, 95
      %v520 = vpop.permute.xlu0 %519
      %521 = vrot.lane.b32.xlu0 %v354, 95
      %v522 = vpop.permute.xlu0 %521
      %vm523 = vcmask 777216
      %v524 = vsel %vm523, %v518, %v520
      %v525 = vsel %vm523, %v520, %v522
      %531 = vrot.lane.b32.xlu0 %v434, 94
      %v532 = vpop.permute.xlu0 %531
      %533 = vrot.lane.b32.xlu0 %v435, 94
      %v534 = vpop.permute.xlu0 %533
      %535 = vrot.lane.b32.xlu0 %v436, 94
      %v536 = vpop.permute.xlu0 %535
      %vm537 = vcmask 769024
      %v538 = vsel %vm537, %v532, %v534
      %v539 = vsel %vm537, %v534, %v536
      %v542 = vpack.c.bf16 %v446, %v366
      %v543 = vpack.c.bf16 %v447, %v367
      %v544 = vpack.c.bf16 %v474, %v460
      %v545 = vpack.c.bf16 %v475, %v461
      %v546 = vpack.c.bf16 %v499, %v485
      %v547 = vpack.c.bf16 %v500, %v486
      %v548 = vpack.c.bf16 %v524, %v513
      %v549 = vpack.c.bf16 %v525, %v514
      %v550 = vpack.c.bf16 %v538, %v538
      %v551 = vpack.c.bf16 %v539, %v539
      %553 = vset.pattern.permute.xlu0 0
      %554 = vperm.xlu0 %553, %v341
      %v555 = vpop.permute.xlu0 %554
      %vm557 = vcmask 588800
      %v559 = vsel %vm557, %v340, 0
      %vm561 = vcmask 1043456
      %v563 = vsel %vm561, %v550, 0
      %v566 = vsel %vm561, %v551, 0
      %568 = vmatprep.subr.bf16.mxu0 %v543
      %569 = vmatpush1.bf16.msra.mxu0 %v542
      %570 = vmatprep.subr.bf16.mxu0 %v545
      %571 = vmatpush1.bf16.msra.mxu0 %v544
      %572 = vmatprep.subr.bf16.mxu0 %v547
      %573 = vmatpush1.bf16.msra.mxu0 %v546
      %574 = vmatprep.subr.bf16.mxu0 %v549
      %575 = vmatpush1.bf16.msra.mxu0 %v548
      %576 = vmatprep.subr.bf16.mxu0 %v566
      %577 = vmatpush1.bf16.msra.mxu0 %v563
      %578 = vmatprep.subr.bf16.mxu0 0
      %579 = vmatpush1.bf16.msra.mxu0 0
      %580 = vmatprep.subr.bf16.mxu0 0
      %581 = vmatpush1.bf16.msra.mxu0 0
      %582 = vmatprep.subr.bf16.mxu0 0
      %583 = vmatpush1.bf16.msra.mxu0 0
      %584 = vmatprep.subr.bf16.mxu0 0
      %585 = vmatpush1.bf16.msra.mxu0 0
      %586 = vmatprep.subr.bf16.mxu0 0
      %587 = vmatpush1.bf16.msra.mxu0 0
      %588 = vmatprep.subr.bf16.mxu0 0
      %589 = vmatpush1.bf16.msra.mxu0 0
      %590 = vmatprep.subr.bf16.mxu0 0
      %591 = vmatpush1.bf16.msra.mxu0 0
      %592 = vmatprep.subr.bf16.mxu0 0
      %593 = vmatpush1.bf16.msra.mxu0 0
      %594 = vmatprep.subr.bf16.mxu0 0
      %595 = vmatpush1.bf16.msra.mxu0 0
      %596 = vmatprep.subr.bf16.mxu0 0
      %597 = vmatpush1.bf16.msra.mxu0 0
      %598 = vmatprep.subr.bf16.mxu0 0
      %599 = vmatpush1.bf16.msra.mxu0 0
      %600 = vmatprep.mubr.bf16.mxu0 0
      %601 = vmatmul.mubr.bf16.gmra.mrb[0].mxu0 %v559
      %v602 = vpop.f32.mrb[0].mxu0
      %v603 = vadd.f32 %v555, %v602
      %v604 = vpop.f32.mrb[0].mxu0
      %v605 = vadd.f32 %v555, %v604
      %v606 = vpop.f32.mrb[0].mxu0
      %v607 = vpop.f32.mrb[0].mxu0
      %608 = vdwg.mxu0
      %v609 = vmax.f32 %v603, 0.0
      %v610 = vmax.f32 %v605, 0.0
      %s611 = scalar_lea.vmem %s4, 4
      %v612 = vld [vmem:[%s611] sm:$0xf]
      %s613 = scalar_lea.vmem %s5, 8
      %v614 = vld [vmem:[%s613] sm:$0xff]
      %617 = vrot.lane.b32.xlu0 %v609, 17
      %v618 = vpop.permute.xlu0 %617
      %619 = vrot.lane.b32.xlu0 %v610, 17
      %v620 = vpop.permute.xlu0 %619
      %v621 = vsel %vm348, %v618, %v620
      %v625 = vsel %vm348, 0.0, %v618
      %v626 = vsel %vm348, %v620, 0.0
      %v627 = vmul.f32 %v625, %v359
      %v628 = vmul.f32 %v621, %v363
      %v629 = vmul.f32 %v625, %v378
      %v630 = vmul.f32 %v621, %v382
      %v631 = vmul.f32 %v626, %v380
      %v632 = vmul.f32 %v625, %v390
      %v633 = vmul.f32 %v621, %v394
      %v634 = vmul.f32 %v626, %v392
      %v635 = vmul.f32 %v625, %v402
      %v636 = vmul.f32 %v621, %v406
      %v637 = vmul.f32 %v626, %v404
      %v638 = vmul.f32 %v625, %v414
      %v639 = vmul.f32 %v621, %v418
      %v640 = vmul.f32 %v626, %v416
      %v641 = vmul.f32 %v625, %v426
      %v642 = vmul.f32 %v621, %v430
      %v643 = vmul.f32 %v626, %v428
      %646 = vrot.lane.b32.xlu0 %v625, 127
      %v647 = vpop.permute.xlu0 %646
      %648 = vrot.lane.b32.xlu0 %v621, 127
      %v649 = vpop.permute.xlu0 %648
      %650 = vrot.lane.b32.xlu0 %v626, 127
      %v651 = vpop.permute.xlu0 %650
      %v652 = vsel %vm445, %v647, %v649
      %v653 = vsel %vm445, %v649, %v651
      %659 = vrot.lane.b32.xlu0 %v629, 126
      %v660 = vpop.permute.xlu0 %659
      %661 = vrot.lane.b32.xlu0 %v630, 126
      %v662 = vpop.permute.xlu0 %661
      %663 = vrot.lane.b32.xlu0 %v631, 126
      %v664 = vpop.permute.xlu0 %663
      %v665 = vsel %vm459, %v660, %v662
      %v666 = vsel %vm459, %v662, %v664
      %672 = vrot.lane.b32.xlu0 %v632, 112
      %v673 = vpop.permute.xlu0 %672
      %674 = vrot.lane.b32.xlu0 %v633, 112
      %v675 = vpop.permute.xlu0 %674
      %676 = vrot.lane.b32.xlu0 %v634, 112
      %v677 = vpop.permute.xlu0 %676
      %v678 = vsel %vm473, %v673, %v675
      %v679 = vsel %vm473, %v675, %v677
      %682 = vrot.lane.b32.xlu0 %v625, 111
      %v683 = vpop.permute.xlu0 %682
      %684 = vrot.lane.b32.xlu0 %v621, 111
      %v685 = vpop.permute.xlu0 %684
      %686 = vrot.lane.b32.xlu0 %v626, 111
      %v687 = vpop.permute.xlu0 %686
      %v688 = vsel %vm484, %v683, %v685
      %v689 = vsel %vm484, %v685, %v687
      %695 = vrot.lane.b32.xlu0 %v635, 110
      %v696 = vpop.permute.xlu0 %695
      %697 = vrot.lane.b32.xlu0 %v636, 110
      %v698 = vpop.permute.xlu0 %697
      %699 = vrot.lane.b32.xlu0 %v637, 110
      %v700 = vpop.permute.xlu0 %699
      %v701 = vsel %vm498, %v696, %v698
      %v702 = vsel %vm498, %v698, %v700
      %708 = vrot.lane.b32.xlu0 %v638, 96
      %v709 = vpop.permute.xlu0 %708
      %710 = vrot.lane.b32.xlu0 %v639, 96
      %v711 = vpop.permute.xlu0 %710
      %712 = vrot.lane.b32.xlu0 %v640, 96
      %v713 = vpop.permute.xlu0 %712
      %v714 = vsel %vm512, %v709, %v711
      %v715 = vsel %vm512, %v711, %v713
      %718 = vrot.lane.b32.xlu0 %v625, 95
      %v719 = vpop.permute.xlu0 %718
      %720 = vrot.lane.b32.xlu0 %v621, 95
      %v721 = vpop.permute.xlu0 %720
      %722 = vrot.lane.b32.xlu0 %v626, 95
      %v723 = vpop.permute.xlu0 %722
      %v724 = vsel %vm523, %v719, %v721
      %v725 = vsel %vm523, %v721, %v723
      %731 = vrot.lane.b32.xlu0 %v641, 94
      %v732 = vpop.permute.xlu0 %731
      %733 = vrot.lane.b32.xlu0 %v642, 94
      %v734 = vpop.permute.xlu0 %733
      %735 = vrot.lane.b32.xlu0 %v643, 94
      %v736 = vpop.permute.xlu0 %735
      %v737 = vsel %vm537, %v732, %v734
      %v738 = vsel %vm537, %v734, %v736
      %v741 = vpack.c.bf16 %v652, %v627
      %v742 = vpack.c.bf16 %v653, %v628
      %v743 = vpack.c.bf16 %v678, %v665
      %v744 = vpack.c.bf16 %v679, %v666
      %v745 = vpack.c.bf16 %v701, %v688
      %v746 = vpack.c.bf16 %v702, %v689
      %v747 = vpack.c.bf16 %v724, %v714
      %v748 = vpack.c.bf16 %v725, %v715
      %v749 = vpack.c.bf16 %v737, %v737
      %v750 = vpack.c.bf16 %v738, %v738
      %752 = vset.pattern.permute.xlu0 0
      %753 = vperm.xlu0 %752, %v614
      %v754 = vpop.permute.xlu0 %753
      %v757 = vsel %vm557, %v612, 0
      %v760 = vsel %vm561, %v749, 0
      %v763 = vsel %vm561, %v750, 0
      %765 = vmatprep.subr.bf16.mxu0 %v742
      %766 = vmatpush1.bf16.msra.mxu0 %v741
      %767 = vmatprep.subr.bf16.mxu0 %v744
      %768 = vmatpush1.bf16.msra.mxu0 %v743
      %769 = vmatprep.subr.bf16.mxu0 %v746
      %770 = vmatpush1.bf16.msra.mxu0 %v745
      %771 = vmatprep.subr.bf16.mxu0 %v748
      %772 = vmatpush1.bf16.msra.mxu0 %v747
      %773 = vmatprep.subr.bf16.mxu0 %v763
      %774 = vmatpush1.bf16.msra.mxu0 %v760
      %775 = vmatprep.subr.bf16.mxu0 0
      %776 = vmatpush1.bf16.msra.mxu0 0
      %777 = vmatprep.subr.bf16.mxu0 0
      %778 = vmatpush1.bf16.msra.mxu0 0
      %779 = vmatprep.subr.bf16.mxu0 0
      %780 = vmatpush1.bf16.msra.mxu0 0
      %781 = vmatprep.subr.bf16.mxu0 0
      %782 = vmatpush1.bf16.msra.mxu0 0
      %783 = vmatprep.subr.bf16.mxu0 0
      %784 = vmatpush1.bf16.msra.mxu0 0
      %785 = vmatprep.subr.bf16.mxu0 0
      %786 = vmatpush1.bf16.msra.mxu0 0
      %787 = vmatprep.subr.bf16.mxu0 0
      %788 = vmatpush1.bf16.msra.mxu0 0
      %789 = vmatprep.subr.bf16.mxu0 0
      %790 = vmatpush1.bf16.msra.mxu0 0
      %791 = vmatprep.subr.bf16.mxu0 0
      %792 = vmatpush1.bf16.msra.mxu0 0
      %793 = vmatprep.subr.bf16.mxu0 0
      %794 = vmatpush1.bf16.msra.mxu0 0
      %795 = vmatprep.subr.bf16.mxu0 0
      %796 = vmatpush1.bf16.msra.mxu0 0
      %797 = vmatprep.mubr.bf16.mxu0 0
      %798 = vmatmul.mubr.bf16.gmra.mrb[0].mxu0 %v757
      %v799 = vpop.f32.mrb[0].mxu0
      %v800 = vadd.f32 %v754, %v799
      %v801 = vpop.f32.mrb[0].mxu0
      %v802 = vadd.f32 %v754, %v801
      %v803 = vpop.f32.mrb[0].mxu0
      %v804 = vpop.f32.mrb[0].mxu0
      %805 = vdwg.mxu0
      %v806 = vmax.f32 %v800, 0.0
      %v807 = vmax.f32 %v802, 0.0
      %s808 = scalar_lea.vmem %s4, 8
      %v809 = vld [vmem:[%s808] sm:$0xf]
      %s810 = scalar_lea.vmem %s5, 16
      %v811 = vld [vmem:[%s810] sm:$0xff]
      %814 = vrot.lane.b32.xlu0 %v806, 17
      %v815 = vpop.permute.xlu0 %814
      %816 = vrot.lane.b32.xlu0 %v807, 17
      %v817 = vpop.permute.xlu0 %816
      %v818 = vsel %vm348, %v815, %v817
      %v822 = vsel %vm348, 0.0, %v815
      %v823 = vsel %vm348, %v817, 0.0
      %v824 = vmul.f32 %v822, %v359
      %v825 = vmul.f32 %v818, %v363
      %v826 = vmul.f32 %v822, %v378
      %v827 = vmul.f32 %v818, %v382
      %v828 = vmul.f32 %v823, %v380
      %v829 = vmul.f32 %v822, %v390
      %v830 = vmul.f32 %v818, %v394
      %v831 = vmul.f32 %v823, %v392
      %v832 = vmul.f32 %v822, %v402
      %v833 = vmul.f32 %v818, %v406
      %v834 = vmul.f32 %v823, %v404
      %v835 = vmul.f32 %v822, %v414
      %v836 = vmul.f32 %v818, %v418
      %v837 = vmul.f32 %v823, %v416
      %v838 = vmul.f32 %v822, %v426
      %v839 = vmul.f32 %v818, %v430
      %v840 = vmul.f32 %v823, %v428
      %843 = vrot.lane.b32.xlu0 %v822, 127
      %v844 = vpop.permute.xlu0 %843
      %845 = vrot.lane.b32.xlu0 %v818, 127
      %v846 = vpop.permute.xlu0 %845
      %847 = vrot.lane.b32.xlu0 %v823, 127
      %v848 = vpop.permute.xlu0 %847
      %v849 = vsel %vm445, %v844, %v846
      %v850 = vsel %vm445, %v846, %v848
      %856 = vrot.lane.b32.xlu0 %v826, 126
      %v857 = vpop.permute.xlu0 %856
      %858 = vrot.lane.b32.xlu0 %v827, 126
      %v859 = vpop.permute.xlu0 %858
      %860 = vrot.lane.b32.xlu0 %v828, 126
      %v861 = vpop.permute.xlu0 %860
      %v862 = vsel %vm459, %v857, %v859
      %v863 = vsel %vm459, %v859, %v861
      %869 = vrot.lane.b32.xlu0 %v829, 112
      %v870 = vpop.permute.xlu0 %869
      %871 = vrot.lane.b32.xlu0 %v830, 112
      %v872 = vpop.permute.xlu0 %871
      %873 = vrot.lane.b32.xlu0 %v831, 112
      %v874 = vpop.permute.xlu0 %873
      %v875 = vsel %vm473, %v870, %v872
      %v876 = vsel %vm473, %v872, %v874
      %879 = vrot.lane.b32.xlu0 %v822, 111
      %v880 = vpop.permute.xlu0 %879
      %881 = vrot.lane.b32.xlu0 %v818, 111
      %v882 = vpop.permute.xlu0 %881
      %883 = vrot.lane.b32.xlu0 %v823, 111
      %v884 = vpop.permute.xlu0 %883
      %v885 = vsel %vm484, %v880, %v882
      %v886 = vsel %vm484, %v882, %v884
      %892 = vrot.lane.b32.xlu0 %v832, 110
      %v893 = vpop.permute.xlu0 %892
      %894 = vrot.lane.b32.xlu0 %v833, 110
      %v895 = vpop.permute.xlu0 %894
      %896 = vrot.lane.b32.xlu0 %v834, 110
      %v897 = vpop.permute.xlu0 %896
      %v898 = vsel %vm498, %v893, %v895
      %v899 = vsel %vm498, %v895, %v897
      %905 = vrot.lane.b32.xlu0 %v835, 96
      %v906 = vpop.permute.xlu0 %905
      %907 = vrot.lane.b32.xlu0 %v836, 96
      %v908 = vpop.permute.xlu0 %907
      %909 = vrot.lane.b32.xlu0 %v837, 96
      %v910 = vpop.permute.xlu0 %909
      %v911 = vsel %vm512, %v906, %v908
      %v912 = vsel %vm512, %v908, %v910
      %915 = vrot.lane.b32.xlu0 %v822, 95
      %v916 = vpop.permute.xlu0 %915
      %917 = vrot.lane.b32.xlu0 %v818, 95
      %v918 = vpop.permute.xlu0 %917
      %919 = vrot.lane.b32.xlu0 %v823, 95
      %v920 = vpop.permute.xlu0 %919
      %v921 = vsel %vm523, %v916, %v918
      %v922 = vsel %vm523, %v918, %v920
      %928 = vrot.lane.b32.xlu0 %v838, 94
      %v929 = vpop.permute.xlu0 %928
      %930 = vrot.lane.b32.xlu0 %v839, 94
      %v931 = vpop.permute.xlu0 %930
      %932 = vrot.lane.b32.xlu0 %v840, 94
      %v933 = vpop.permute.xlu0 %932
      %v934 = vsel %vm537, %v929, %v931
      %v935 = vsel %vm537, %v931, %v933
      %v938 = vpack.c.bf16 %v849, %v824
      %v939 = vpack.c.bf16 %v850, %v825
      %v940 = vpack.c.bf16 %v875, %v862
      %v941 = vpack.c.bf16 %v876, %v863
      %v942 = vpack.c.bf16 %v898, %v885
      %v943 = vpack.c.bf16 %v899, %v886
      %v944 = vpack.c.bf16 %v921, %v911
      %v945 = vpack.c.bf16 %v922, %v912
      %v946 = vpack.c.bf16 %v934, %v934
      %v947 = vpack.c.bf16 %v935, %v935
      %949 = vset.pattern.permute.xlu0 0
      %950 = vperm.xlu0 %949, %v811
      %v951 = vpop.permute.xlu0 %950
      %v954 = vsel %vm557, %v809, 0
      %v957 = vsel %vm561, %v946, 0
      %v960 = vsel %vm561, %v947, 0
      %962 = vmatprep.subr.bf16.mxu0 %v939
      %963 = vmatpush1.bf16.msra.mxu0 %v938
      %964 = vmatprep.subr.bf16.mxu0 %v941
      %965 = vmatpush1.bf16.msra.mxu0 %v940
      %966 = vmatprep.subr.bf16.mxu0 %v943
      %967 = vmatpush1.bf16.msra.mxu0 %v942
      %968 = vmatprep.subr.bf16.mxu0 %v945
      %969 = vmatpush1.bf16.msra.mxu0 %v944
      %970 = vmatprep.subr.bf16.mxu0 %v960
      %971 = vmatpush1.bf16.msra.mxu0 %v957
      %972 = vmatprep.subr.bf16.mxu0 0
      %973 = vmatpush1.bf16.msra.mxu0 0
      %974 = vmatprep.subr.bf16.mxu0 0
      %975 = vmatpush1.bf16.msra.mxu0 0
      %976 = vmatprep.subr.bf16.mxu0 0
      %977 = vmatpush1.bf16.msra.mxu0 0
      %978 = vmatprep.subr.bf16.mxu0 0
      %979 = vmatpush1.bf16.msra.mxu0 0
      %980 = vmatprep.subr.bf16.mxu0 0
      %981 = vmatpush1.bf16.msra.mxu0 0
      %982 = vmatprep.subr.bf16.mxu0 0
      %983 = vmatpush1.bf16.msra.mxu0 0
      %984 = vmatprep.subr.bf16.mxu0 0
      %985 = vmatpush1.bf16.msra.mxu0 0
      %986 = vmatprep.subr.bf16.mxu0 0
      %987 = vmatpush1.bf16.msra.mxu0 0
      %988 = vmatprep.subr.bf16.mxu0 0
      %989 = vmatpush1.bf16.msra.mxu0 0
      %990 = vmatprep.subr.bf16.mxu0 0
      %991 = vmatpush1.bf16.msra.mxu0 0
      %992 = vmatprep.subr.bf16.mxu0 0
      %993 = vmatpush1.bf16.msra.mxu0 0
      %994 = vmatprep.mubr.bf16.mxu0 0
      %995 = vmatmul.mubr.bf16.gmra.mrb[0].mxu0 %v954
      %v996 = vpop.f32.mrb[0].mxu0
      %v997 = vadd.f32 %v951, %v996
      %v998 = vpop.f32.mrb[0].mxu0
      %v999 = vadd.f32 %v951, %v998
      %v1000 = vpop.f32.mrb[0].mxu0
      %v1001 = vpop.f32.mrb[0].mxu0
      %1002 = vdwg.mxu0
      %v1003 = vld [vmem:[%s313] sm:$0x77]
      %v1005 = vcombine.high %v1003, %v1003
      %v1009 = vrot.slane %v997, 5
      %v1010 = vrot.slane %v999, 5
      %v1013 = vsel %vm337, %v1003, %v1009
      %v1014 = vsel %vm337, %v1005, %v1010
      %vm1015 = vcmask 1045504
      %v1016 = vsel %vm1015, %v1013, 0.0
      %v1017 = vsel %vm1015, %v1014, 0.0
      %s1018 = scalar_lea.vmem %s4, 12
      %v1019 = vld [vmem:[%s1018] sm:$0xf]
      %s1020 = scalar_lea.vmem %s5, 24
      %v1021 = vld [vmem:[%s1020] sm:$0xff]
      %1024 = vrot.lane.b32.xlu0 %v1016, 17
      %v1025 = vpop.permute.xlu0 %1024
      %1026 = vrot.lane.b32.xlu0 %v1017, 17
      %v1027 = vpop.permute.xlu0 %1026
      %v1028 = vsel %vm348, %v1025, %v1027
      %v1032 = vsel %vm348, 0.0, %v1025
      %v1033 = vsel %vm348, %v1027, 0.0
      %v1034 = vmul.f32 %v1032, %v359
      %v1035 = vmul.f32 %v1028, %v363
      %v1036 = vmul.f32 %v1032, %v378
      %v1037 = vmul.f32 %v1028, %v382
      %v1038 = vmul.f32 %v1033, %v380
      %v1039 = vmul.f32 %v1032, %v390
      %v1040 = vmul.f32 %v1028, %v394
      %v1041 = vmul.f32 %v1033, %v392
      %v1042 = vmul.f32 %v1032, %v402
      %v1043 = vmul.f32 %v1028, %v406
      %v1044 = vmul.f32 %v1033, %v404
      %v1045 = vmul.f32 %v1032, %v414
      %v1046 = vmul.f32 %v1028, %v418
      %v1047 = vmul.f32 %v1033, %v416
      %v1048 = vmul.f32 %v1032, %v426
      %v1049 = vmul.f32 %v1028, %v430
      %v1050 = vmul.f32 %v1033, %v428
      %1053 = vrot.lane.b32.xlu0 %v1032, 127
      %v1054 = vpop.permute.xlu0 %1053
      %1055 = vrot.lane.b32.xlu0 %v1028, 127
      %v1056 = vpop.permute.xlu0 %1055
      %1057 = vrot.lane.b32.xlu0 %v1033, 127
      %v1058 = vpop.permute.xlu0 %1057
      %v1059 = vsel %vm445, %v1054, %v1056
      %v1060 = vsel %vm445, %v1056, %v1058
      %1066 = vrot.lane.b32.xlu0 %v1036, 126
      %v1067 = vpop.permute.xlu0 %1066
      %1068 = vrot.lane.b32.xlu0 %v1037, 126
      %v1069 = vpop.permute.xlu0 %1068
      %1070 = vrot.lane.b32.xlu0 %v1038, 126
      %v1071 = vpop.permute.xlu0 %1070
      %v1072 = vsel %vm459, %v1067, %v1069
      %v1073 = vsel %vm459, %v1069, %v1071
      %1079 = vrot.lane.b32.xlu0 %v1039, 112
      %v1080 = vpop.permute.xlu0 %1079
      %1081 = vrot.lane.b32.xlu0 %v1040, 112
      %v1082 = vpop.permute.xlu0 %1081
      %1083 = vrot.lane.b32.xlu0 %v1041, 112
      %v1084 = vpop.permute.xlu0 %1083
      %v1085 = vsel %vm473, %v1080, %v1082
      %v1086 = vsel %vm473, %v1082, %v1084
      %1089 = vrot.lane.b32.xlu0 %v1032, 111
      %v1090 = vpop.permute.xlu0 %1089
      %1091 = vrot.lane.b32.xlu0 %v1028, 111
      %v1092 = vpop.permute.xlu0 %1091
      %1093 = vrot.lane.b32.xlu0 %v1033, 111
      %v1094 = vpop.permute.xlu0 %1093
      %v1095 = vsel %vm484, %v1090, %v1092
      %v1096 = vsel %vm484, %v1092, %v1094
      %1102 = vrot.lane.b32.xlu0 %v1042, 110
      %v1103 = vpop.permute.xlu0 %1102
      %1104 = vrot.lane.b32.xlu0 %v1043, 110
      %v1105 = vpop.permute.xlu0 %1104
      %1106 = vrot.lane.b32.xlu0 %v1044, 110
      %v1107 = vpop.permute.xlu0 %1106
      %v1108 = vsel %vm498, %v1103, %v1105
      %v1109 = vsel %vm498, %v1105, %v1107
      %1115 = vrot.lane.b32.xlu0 %v1045, 96
      %v1116 = vpop.permute.xlu0 %1115
      %1117 = vrot.lane.b32.xlu0 %v1046, 96
      %v1118 = vpop.permute.xlu0 %1117
      %1119 = vrot.lane.b32.xlu0 %v1047, 96
      %v1120 = vpop.permute.xlu0 %1119
      %v1121 = vsel %vm512, %v1116, %v1118
      %v1122 = vsel %vm512, %v1118, %v1120
      %1125 = vrot.lane.b32.xlu0 %v1032, 95
      %v1126 = vpop.permute.xlu0 %1125
      %1127 = vrot.lane.b32.xlu0 %v1028, 95
      %v1128 = vpop.permute.xlu0 %1127
      %1129 = vrot.lane.b32.xlu0 %v1033, 95
      %v1130 = vpop.permute.xlu0 %1129
      %v1131 = vsel %vm523, %v1126, %v1128
      %v1132 = vsel %vm523, %v1128, %v1130
      %1138 = vrot.lane.b32.xlu0 %v1048, 94
      %v1139 = vpop.permute.xlu0 %1138
      %1140 = vrot.lane.b32.xlu0 %v1049, 94
      %v1141 = vpop.permute.xlu0 %1140
      %1142 = vrot.lane.b32.xlu0 %v1050, 94
      %v1143 = vpop.permute.xlu0 %1142
      %v1144 = vsel %vm537, %v1139, %v1141
      %v1145 = vsel %vm537, %v1141, %v1143
      %v1148 = vpack.c.bf16 %v1059, %v1034
      %v1149 = vpack.c.bf16 %v1060, %v1035
      %v1150 = vpack.c.bf16 %v1085, %v1072
      %v1151 = vpack.c.bf16 %v1086, %v1073
      %v1152 = vpack.c.bf16 %v1108, %v1095
      %v1153 = vpack.c.bf16 %v1109, %v1096
      %v1154 = vpack.c.bf16 %v1131, %v1121
      %v1155 = vpack.c.bf16 %v1132, %v1122
      %v1156 = vpack.c.bf16 %v1144, %v1144
      %v1157 = vpack.c.bf16 %v1145, %v1145
      %1159 = vset.pattern.permute.xlu0 0
      %1160 = vperm.xlu0 %1159, %v1021
      %v1161 = vpop.permute.xlu0 %1160
      %v1164 = vsel %vm557, %v1019, 0
      %v1167 = vsel %vm561, %v1156, 0
      %v1170 = vsel %vm561, %v1157, 0
      %1172 = vmatprep.subr.bf16.mxu0 %v1149
      %1173 = vmatpush1.bf16.msra.mxu0 %v1148
      %1174 = vmatprep.subr.bf16.mxu0 %v1151
      %1175 = vmatpush1.bf16.msra.mxu0 %v1150
      %1176 = vmatprep.subr.bf16.mxu0 %v1153
      %1177 = vmatpush1.bf16.msra.mxu0 %v1152
      %1178 = vmatprep.subr.bf16.mxu0 %v1155
      %1179 = vmatpush1.bf16.msra.mxu0 %v1154
      %1180 = vmatprep.subr.bf16.mxu0 %v1170
      %1181 = vmatpush1.bf16.msra.mxu0 %v1167
      %1182 = vmatprep.subr.bf16.mxu0 0
      %1183 = vmatpush1.bf16.msra.mxu0 0
      %1184 = vmatprep.subr.bf16.mxu0 0
      %1185 = vmatpush1.bf16.msra.mxu0 0
      %1186 = vmatprep.subr.bf16.mxu0 0
      %1187 = vmatpush1.bf16.msra.mxu0 0
      %1188 = vmatprep.subr.bf16.mxu0 0
      %1189 = vmatpush1.bf16.msra.mxu0 0
      %1190 = vmatprep.subr.bf16.mxu0 0
      %1191 = vmatpush1.bf16.msra.mxu0 0
      %1192 = vmatprep.subr.bf16.mxu0 0
      %1193 = vmatpush1.bf16.msra.mxu0 0
      %1194 = vmatprep.subr.bf16.mxu0 0
      %1195 = vmatpush1.bf16.msra.mxu0 0
      %1196 = vmatprep.subr.bf16.mxu0 0
      %1197 = vmatpush1.bf16.msra.mxu0 0
      %1198 = vmatprep.subr.bf16.mxu0 0
      %1199 = vmatpush1.bf16.msra.mxu0 0
      %1200 = vmatprep.subr.bf16.mxu0 0
      %1201 = vmatpush1.bf16.msra.mxu0 0
      %1202 = vmatprep.subr.bf16.mxu0 0
      %1203 = vmatpush1.bf16.msra.mxu0 0
      %1204 = vmatprep.mubr.bf16.mxu0 0
      %1205 = vmatmul.mubr.bf16.gmra.mrb[0].mxu0 %v1164
      %v1206 = vpop.f32.mrb[0].mxu0
      %v1207 = vadd.f32 %v1161, %v1206
      %v1208 = vpop.f32.mrb[0].mxu0
      %v1209 = vadd.f32 %v1161, %v1208
      %v1210 = vpop.f32.mrb[0].mxu0
      %v1211 = vpop.f32.mrb[0].mxu0
      %1212 = vdwg.mxu0
      %v1213 = vmax.f32 %v1207, 0.0
      %v1214 = vmax.f32 %v1209, 0.0
      %s1215 = scalar_lea.vmem %s4, 16
      %v1216 = vld [vmem:[%s1215] sm:$0xf]
      %s1217 = scalar_lea.vmem %s5, 32
      %v1218 = vld [vmem:[%s1217] sm:$0xff]
      %1221 = vrot.lane.b32.xlu0 %v1213, 17
      %v1222 = vpop.permute.xlu0 %1221
      %1223 = vrot.lane.b32.xlu0 %v1214, 17
      %v1224 = vpop.permute.xlu0 %1223
      %v1225 = vsel %vm348, %v1222, %v1224
      %v1229 = vsel %vm348, 0.0, %v1222
      %v1230 = vsel %vm348, %v1224, 0.0
      %v1231 = vmul.f32 %v1229, %v359
      %v1232 = vmul.f32 %v1225, %v363
      %v1233 = vmul.f32 %v1229, %v378
      %v1234 = vmul.f32 %v1225, %v382
      %v1235 = vmul.f32 %v1230, %v380
      %v1236 = vmul.f32 %v1229, %v390
      %v1237 = vmul.f32 %v1225, %v394
      %v1238 = vmul.f32 %v1230, %v392
      %v1239 = vmul.f32 %v1229, %v402
      %v1240 = vmul.f32 %v1225, %v406
      %v1241 = vmul.f32 %v1230, %v404
      %v1242 = vmul.f32 %v1229, %v414
      %v1243 = vmul.f32 %v1225, %v418
      %v1244 = vmul.f32 %v1230, %v416
      %v1245 = vmul.f32 %v1229, %v426
      %v1246 = vmul.f32 %v1225, %v430
      %v1247 = vmul.f32 %v1230, %v428
      %1250 = vrot.lane.b32.xlu0 %v1229, 127
      %v1251 = vpop.permute.xlu0 %1250
      %1252 = vrot.lane.b32.xlu0 %v1225, 127
      %v1253 = vpop.permute.xlu0 %1252
      %1254 = vrot.lane.b32.xlu0 %v1230, 127
      %v1255 = vpop.permute.xlu0 %1254
      %v1256 = vsel %vm445, %v1251, %v1253
      %v1257 = vsel %vm445, %v1253, %v1255
      %1263 = vrot.lane.b32.xlu0 %v1233, 126
      %v1264 = vpop.permute.xlu0 %1263
      %1265 = vrot.lane.b32.xlu0 %v1234, 126
      %v1266 = vpop.permute.xlu0 %1265
      %1267 = vrot.lane.b32.xlu0 %v1235, 126
      %v1268 = vpop.permute.xlu0 %1267
      %v1269 = vsel %vm459, %v1264, %v1266
      %v1270 = vsel %vm459, %v1266, %v1268
      %1276 = vrot.lane.b32.xlu0 %v1236, 112
      %v1277 = vpop.permute.xlu0 %1276
      %1278 = vrot.lane.b32.xlu0 %v1237, 112
      %v1279 = vpop.permute.xlu0 %1278
      %1280 = vrot.lane.b32.xlu0 %v1238, 112
      %v1281 = vpop.permute.xlu0 %1280
      %v1282 = vsel %vm473, %v1277, %v1279
      %v1283 = vsel %vm473, %v1279, %v1281
      %1286 = vrot.lane.b32.xlu0 %v1229, 111
      %v1287 = vpop.permute.xlu0 %1286
      %1288 = vrot.lane.b32.xlu0 %v1225, 111
      %v1289 = vpop.permute.xlu0 %1288
      %1290 = vrot.lane.b32.xlu0 %v1230, 111
      %v1291 = vpop.permute.xlu0 %1290
      %v1292 = vsel %vm484, %v1287, %v1289
      %v1293 = vsel %vm484, %v1289, %v1291
      %1299 = vrot.lane.b32.xlu0 %v1239, 110
      %v1300 = vpop.permute.xlu0 %1299
      %1301 = vrot.lane.b32.xlu0 %v1240, 110
      %v1302 = vpop.permute.xlu0 %1301
      %1303 = vrot.lane.b32.xlu0 %v1241, 110
      %v1304 = vpop.permute.xlu0 %1303
      %v1305 = vsel %vm498, %v1300, %v1302
      %v1306 = vsel %vm498, %v1302, %v1304
      %1312 = vrot.lane.b32.xlu0 %v1242, 96
      %v1313 = vpop.permute.xlu0 %1312
      %1314 = vrot.lane.b32.xlu0 %v1243, 96
      %v1315 = vpop.permute.xlu0 %1314
      %1316 = vrot.lane.b32.xlu0 %v1244, 96
      %v1317 = vpop.permute.xlu0 %1316
      %v1318 = vsel %vm512, %v1313, %v1315
      %v1319 = vsel %vm512, %v1315, %v1317
      %1322 = vrot.lane.b32.xlu0 %v1229, 95
      %v1323 = vpop.permute.xlu0 %1322
      %1324 = vrot.lane.b32.xlu0 %v1225, 95
      %v1325 = vpop.permute.xlu0 %1324
      %1326 = vrot.lane.b32.xlu0 %v1230, 95
      %v1327 = vpop.permute.xlu0 %1326
      %v1328 = vsel %vm523, %v1323, %v1325
      %v1329 = vsel %vm523, %v1325, %v1327
      %1335 = vrot.lane.b32.xlu0 %v1245, 94
      %v1336 = vpop.permute.xlu0 %1335
      %1337 = vrot.lane.b32.xlu0 %v1246, 94
      %v1338 = vpop.permute.xlu0 %1337
      %1339 = vrot.lane.b32.xlu0 %v1247, 94
      %v1340 = vpop.permute.xlu0 %1339
      %v1341 = vsel %vm537, %v1336, %v1338
      %v1342 = vsel %vm537, %v1338, %v1340
      %v1345 = vpack.c.bf16 %v1256, %v1231
      %v1346 = vpack.c.bf16 %v1257, %v1232
      %v1347 = vpack.c.bf16 %v1282, %v1269
      %v1348 = vpack.c.bf16 %v1283, %v1270
      %v1349 = vpack.c.bf16 %v1305, %v1292
      %v1350 = vpack.c.bf16 %v1306, %v1293
      %v1351 = vpack.c.bf16 %v1328, %v1318
      %v1352 = vpack.c.bf16 %v1329, %v1319
      %v1353 = vpack.c.bf16 %v1341, %v1341
      %v1354 = vpack.c.bf16 %v1342, %v1342
      %1356 = vset.pattern.permute.xlu0 0
      %1357 = vperm.xlu0 %1356, %v1218
      %v1358 = vpop.permute.xlu0 %1357
      %v1361 = vsel %vm557, %v1216, 0
      %v1364 = vsel %vm561, %v1353, 0
      %v1367 = vsel %vm561, %v1354, 0
      %1369 = vmatprep.subr.bf16.mxu0 %v1346
      %1370 = vmatpush1.bf16.msra.mxu0 %v1345
      %1371 = vmatprep.subr.bf16.mxu0 %v1348
      %1372 = vmatpush1.bf16.msra.mxu0 %v1347
      %1373 = vmatprep.subr.bf16.mxu0 %v1350
      %1374 = vmatpush1.bf16.msra.mxu0 %v1349
      %1375 = vmatprep.subr.bf16.mxu0 %v1352
      %1376 = vmatpush1.bf16.msra.mxu0 %v1351
      %1377 = vmatprep.subr.bf16.mxu0 %v1367
      %1378 = vmatpush1.bf16.msra.mxu0 %v1364
      %1379 = vmatprep.subr.bf16.mxu0 0
      %1380 = vmatpush1.bf16.msra.mxu0 0
      %1381 = vmatprep.subr.bf16.mxu0 0
      %1382 = vmatpush1.bf16.msra.mxu0 0
      %1383 = vmatprep.subr.bf16.mxu0 0
      %1384 = vmatpush1.bf16.msra.mxu0 0
      %1385 = vmatprep.subr.bf16.mxu0 0
      %1386 = vmatpush1.bf16.msra.mxu0 0
      %1387 = vmatprep.subr.bf16.mxu0 0
      %1388 = vmatpush1.bf16.msra.mxu0 0
      %1389 = vmatprep.subr.bf16.mxu0 0
      %1390 = vmatpush1.bf16.msra.mxu0 0
      %1391 = vmatprep.subr.bf16.mxu0 0
      %1392 = vmatpush1.bf16.msra.mxu0 0
      %1393 = vmatprep.subr.bf16.mxu0 0
      %1394 = vmatpush1.bf16.msra.mxu0 0
      %1395 = vmatprep.subr.bf16.mxu0 0
      %1396 = vmatpush1.bf16.msra.mxu0 0
      %1397 = vmatprep.subr.bf16.mxu0 0
      %1398 = vmatpush1.bf16.msra.mxu0 0
      %1399 = vmatprep.subr.bf16.mxu0 0
      %1400 = vmatpush1.bf16.msra.mxu0 0
      %1401 = vmatprep.mubr.bf16.mxu0 0
      %1402 = vmatmul.mubr.bf16.gmra.mrb[0].mxu0 %v1361
      %v1403 = vpop.f32.mrb[0].mxu0
      %v1404 = vadd.f32 %v1358, %v1403
      %v1405 = vpop.f32.mrb[0].mxu0
      %v1406 = vadd.f32 %v1358, %v1405
      %v1407 = vpop.f32.mrb[0].mxu0
      %v1408 = vpop.f32.mrb[0].mxu0
      %1409 = vdwg.mxu0
      %v1410 = vmax.f32 %v1404, 0.0
      %v1411 = vmax.f32 %v1406, 0.0
      %s1412 = scalar_lea.vmem %s4, 20
      %v1413 = vld [vmem:[%s1412] sm:$0xf]
      %s1414 = scalar_lea.vmem %s5, 40
      %v1415 = vld [vmem:[%s1414] sm:$0xff]
      %1418 = vrot.lane.b32.xlu0 %v1410, 17
      %v1419 = vpop.permute.xlu0 %1418
      %1420 = vrot.lane.b32.xlu0 %v1411, 17
      %v1421 = vpop.permute.xlu0 %1420
      %v1422 = vsel %vm348, %v1419, %v1421
      %v1426 = vsel %vm348, 0.0, %v1419
      %v1427 = vsel %vm348, %v1421, 0.0
      %v1428 = vmul.f32 %v1426, %v359
      %v1429 = vmul.f32 %v1422, %v363
      %v1430 = vmul.f32 %v1426, %v378
      %v1431 = vmul.f32 %v1422, %v382
      %v1432 = vmul.f32 %v1427, %v380
      %v1433 = vmul.f32 %v1426, %v390
      %v1434 = vmul.f32 %v1422, %v394
      %v1435 = vmul.f32 %v1427, %v392
      %v1436 = vmul.f32 %v1426, %v402
      %v1437 = vmul.f32 %v1422, %v406
      %v1438 = vmul.f32 %v1427, %v404
      %v1439 = vmul.f32 %v1426, %v414
      %v1440 = vmul.f32 %v1422, %v418
      %v1441 = vmul.f32 %v1427, %v416
      %v1442 = vmul.f32 %v1426, %v426
      %v1443 = vmul.f32 %v1422, %v430
      %v1444 = vmul.f32 %v1427, %v428
      %1447 = vrot.lane.b32.xlu0 %v1426, 127
      %v1448 = vpop.permute.xlu0 %1447
      %1449 = vrot.lane.b32.xlu0 %v1422, 127
      %v1450 = vpop.permute.xlu0 %1449
      %1451 = vrot.lane.b32.xlu0 %v1427, 127
      %v1452 = vpop.permute.xlu0 %1451
      %v1453 = vsel %vm445, %v1448, %v1450
      %v1454 = vsel %vm445, %v1450, %v1452
      %1460 = vrot.lane.b32.xlu0 %v1430, 126
      %v1461 = vpop.permute.xlu0 %1460
      %1462 = vrot.lane.b32.xlu0 %v1431, 126
      %v1463 = vpop.permute.xlu0 %1462
      %1464 = vrot.lane.b32.xlu0 %v1432, 126
      %v1465 = vpop.permute.xlu0 %1464
      %v1466 = vsel %vm459, %v1461, %v1463
      %v1467 = vsel %vm459, %v1463, %v1465
      %1473 = vrot.lane.b32.xlu0 %v1433, 112
      %v1474 = vpop.permute.xlu0 %1473
      %1475 = vrot.lane.b32.xlu0 %v1434, 112
      %v1476 = vpop.permute.xlu0 %1475
      %1477 = vrot.lane.b32.xlu0 %v1435, 112
      %v1478 = vpop.permute.xlu0 %1477
      %v1479 = vsel %vm473, %v1474, %v1476
      %v1480 = vsel %vm473, %v1476, %v1478
      %1483 = vrot.lane.b32.xlu0 %v1426, 111
      %v1484 = vpop.permute.xlu0 %1483
      %1485 = vrot.lane.b32.xlu0 %v1422, 111
      %v1486 = vpop.permute.xlu0 %1485
      %1487 = vrot.lane.b32.xlu0 %v1427, 111
      %v1488 = vpop.permute.xlu0 %1487
      %v1489 = vsel %vm484, %v1484, %v1486
      %v1490 = vsel %vm484, %v1486, %v1488
      %1496 = vrot.lane.b32.xlu0 %v1436, 110
      %v1497 = vpop.permute.xlu0 %1496
      %1498 = vrot.lane.b32.xlu0 %v1437, 110
      %v1499 = vpop.permute.xlu0 %1498
      %1500 = vrot.lane.b32.xlu0 %v1438, 110
      %v1501 = vpop.permute.xlu0 %1500
      %v1502 = vsel %vm498, %v1497, %v1499
      %v1503 = vsel %vm498, %v1499, %v1501
      %1509 = vrot.lane.b32.xlu0 %v1439, 96
      %v1510 = vpop.permute.xlu0 %1509
      %1511 = vrot.lane.b32.xlu0 %v1440, 96
      %v1512 = vpop.permute.xlu0 %1511
      %1513 = vrot.lane.b32.xlu0 %v1441, 96
      %v1514 = vpop.permute.xlu0 %1513
      %v1515 = vsel %vm512, %v1510, %v1512
      %v1516 = vsel %vm512, %v1512, %v1514
      %1519 = vrot.lane.b32.xlu0 %v1426, 95
      %v1520 = vpop.permute.xlu0 %1519
      %1521 = vrot.lane.b32.xlu0 %v1422, 95
      %v1522 = vpop.permute.xlu0 %1521
      %1523 = vrot.lane.b32.xlu0 %v1427, 95
      %v1524 = vpop.permute.xlu0 %1523
      %v1525 = vsel %vm523, %v1520, %v1522
      %v1526 = vsel %vm523, %v1522, %v1524
      %1532 = vrot.lane.b32.xlu0 %v1442, 94
      %v1533 = vpop.permute.xlu0 %1532
      %1534 = vrot.lane.b32.xlu0 %v1443, 94
      %v1535 = vpop.permute.xlu0 %1534
      %1536 = vrot.lane.b32.xlu0 %v1444, 94
      %v1537 = vpop.permute.xlu0 %1536
      %v1538 = vsel %vm537, %v1533, %v1535
      %v1539 = vsel %vm537, %v1535, %v1537
      %v1542 = vpack.c.bf16 %v1453, %v1428
      %v1543 = vpack.c.bf16 %v1454, %v1429
      %v1544 = vpack.c.bf16 %v1479, %v1466
      %v1545 = vpack.c.bf16 %v1480, %v1467
      %v1546 = vpack.c.bf16 %v1502, %v1489
      %v1547 = vpack.c.bf16 %v1503, %v1490
      %v1548 = vpack.c.bf16 %v1525, %v1515
      %v1549 = vpack.c.bf16 %v1526, %v1516
      %v1550 = vpack.c.bf16 %v1538, %v1538
      %v1551 = vpack.c.bf16 %v1539, %v1539
      %1553 = vset.pattern.permute.xlu0 0
      %1554 = vperm.xlu0 %1553, %v1415
      %v1555 = vpop.permute.xlu0 %1554
      %v1558 = vsel %vm557, %v1413, 0
      %v1561 = vsel %vm561, %v1550, 0
      %v1564 = vsel %vm561, %v1551, 0
      %1566 = vmatprep.subr.bf16.mxu0 %v1543
      %1567 = vmatpush1.bf16.msra.mxu0 %v1542
      %1568 = vmatprep.subr.bf16.mxu0 %v1545
      %1569 = vmatpush1.bf16.msra.mxu0 %v1544
      %1570 = vmatprep.subr.bf16.mxu0 %v1547
      %1571 = vmatpush1.bf16.msra.mxu0 %v1546
      %1572 = vmatprep.subr.bf16.mxu0 %v1549
      %1573 = vmatpush1.bf16.msra.mxu0 %v1548
      %1574 = vmatprep.subr.bf16.mxu0 %v1564
      %1575 = vmatpush1.bf16.msra.mxu0 %v1561
      %1576 = vmatprep.subr.bf16.mxu0 0
      %1577 = vmatpush1.bf16.msra.mxu0 0
      %1578 = vmatprep.subr.bf16.mxu0 0
      %1579 = vmatpush1.bf16.msra.mxu0 0
      %1580 = vmatprep.subr.bf16.mxu0 0
      %1581 = vmatpush1.bf16.msra.mxu0 0
      %1582 = vmatprep.subr.bf16.mxu0 0
      %1583 = vmatpush1.bf16.msra.mxu0 0
      %1584 = vmatprep.subr.bf16.mxu0 0
      %1585 = vmatpush1.bf16.msra.mxu0 0
      %1586 = vmatprep.subr.bf16.mxu0 0
      %1587 = vmatpush1.bf16.msra.mxu0 0
      %1588 = vmatprep.subr.bf16.mxu0 0
      %1589 = vmatpush1.bf16.msra.mxu0 0
      %1590 = vmatprep.subr.bf16.mxu0 0
      %1591 = vmatpush1.bf16.msra.mxu0 0
      %1592 = vmatprep.subr.bf16.mxu0 0
      %1593 = vmatpush1.bf16.msra.mxu0 0
      %1594 = vmatprep.subr.bf16.mxu0 0
      %1595 = vmatpush1.bf16.msra.mxu0 0
      %1596 = vmatprep.subr.bf16.mxu0 0
      %1597 = vmatpush1.bf16.msra.mxu0 0
      %1598 = vmatprep.mubr.bf16.mxu0 0
      %1599 = vmatmul.mubr.bf16.gmra.mrb[0].mxu0 %v1558
      %v1600 = vpop.f32.mrb[0].mxu0
      %v1601 = vadd.f32 %v1555, %v1600
      %v1602 = vpop.f32.mrb[0].mxu0
      %v1603 = vadd.f32 %v1555, %v1602
      %v1604 = vpop.f32.mrb[0].mxu0
      %v1605 = vpop.f32.mrb[0].mxu0
      %1606 = vdwg.mxu0
      %v1607 = vld [vmem:[%s308] sm:$0x3]
      %v1608 = vsub.f32 1.0, %v1607
      %v1610 = vlaneseq
      %v1611 = vshrl.u32 %v1610, 7
      %v1612 = vsub.s32 0, %v1611
      %v1613 = vrot.slane %v1608, %v1612
      %v1614 = vlaneseq
      %v1615 = vshrl.u32 %v1614, 7
      %v1616 = vsub.s32 1, %v1615
      %v1617 = vrot.slane %v1608, %v1616
      %v1620 = vmul.f32 %v1601, %v1613
      %v1621 = vmul.f32 %v1603, %v1617
      %v1624 = vcombine.low %v1620, %v1621
      %1626 = vst [vmem:[%s323] sm:$0x77] %v1624
      %v1628 = vlaneseq
      %v1629 = vshrl.u32 %v1628, 7
      %v1630 = vsub.s32 0, %v1629
      %v1631 = vrot.slane %v1607, %v1630
      %v1632 = vlaneseq
      %v1633 = vshrl.u32 %v1632, 7
      %v1634 = vsub.s32 1, %v1633
      %v1635 = vrot.slane %v1607, %v1634
      %v1638 = vmul.f32 %v1601, %v1631
      %v1639 = vmul.f32 %v1603, %v1635
      %v1642 = vcombine.low %v1638, %v1639
      %1644 = vst [vmem:[%s328] sm:$0x77] %v1642
      %p1645 = scmp.lt.s32.totalorder %s19, 1
      %s1646 = scalar_select %p1645, %s19, 1
      %s1647 = smul.addr %s1646, 2
      %s1648 = smul.addr %s1647, 4
      %s1649 = scalar_lea.vmem %s6, %s1648
      %p1650 = scmp.lt.s32.totalorder %s19, 1
      %s1651 = scalar_select %p1650, %s19, 1
      %s1652 = smul.addr %s1651, 2
      %s1653 = smul.addr %s1652, 4
      %s1654 = scalar_lea.vmem %s7, %s1653
      // Predicated region
      $region45: #{fused_encode.1} parent=43 // pred_check
        %p1655 = pneg %p178
      $region46: #{fused_encode.1} parent=43 // pred_check_branch
        %1657 = sbr.rel (%p1655) target = $region48
      $region47: #{fused_encode.1} parent=43 // pred_region
        _
      $region48: #{fused_encode.1} parent=43 // pred_fallthru
        _
      // Predicated region
      $region49: #{fused_encode.1} parent=43 // pred_check
        %p1658 = pneg %p204
      $region50: #{fused_encode.1} parent=43 // pred_check_branch
        %1660 = sbr.rel (%p1658) target = $region52
      $region51: #{fused_encode.1} parent=43 // pred_region
        _
      $region52: #{fused_encode.1} parent=43 // pred_fallthru
        _
    $region44: #{fused_encode.1} parent=5 // pred_fallthru
      _
    %p1661 = scmp.le.s32.totalorder 2, %s14
    // Predicated region
    $region53: #{fused_encode.1} parent=5 // pred_check
      %p1662 = pneg %p1661
    $region54: #{fused_encode.1} parent=5 // pred_check_branch
      %1664 = sbr.rel (%p1662) target = $region56
    $region55: #{fused_encode.1} parent=5 // pred_region
      %s1665 = ssub.s32 %s14, 2
      // Predicated region
      $region57: #{fused_encode.1} parent=55 // pred_check
        %p1666 = pneg %p184
      $region58: #{fused_encode.1} parent=55 // pred_check_branch
        %1668 = sbr.rel (%p1666) target = $region60
      $region59: #{fused_encode.1} parent=55 // pred_region
        %p1669 = scmp.lt.s32.totalorder %s20, 1
        %s1670 = scalar_select %p1669, %s20, 1
        %s1671 = smul.addr %s1670, 2
        %s1672 = smul.addr %s1671, 4
        %s1673 = scalar_lea.vmem %s6, %s1672
      $region60: #{fused_encode.1} parent=55 // pred_fallthru
        _
      // Predicated region
      $region61: #{fused_encode.1} parent=55 // pred_check
        %p1674 = pneg %p210
      $region62: #{fused_encode.1} parent=55 // pred_check_branch
        %1676 = sbr.rel (%p1674) target = $region64
      $region63: #{fused_encode.1} parent=55 // pred_region
        %p1677 = scmp.lt.s32.totalorder %s20, 1
        %s1678 = scalar_select %p1677, %s20, 1
        %s1679 = smul.addr %s1678, 2
        %s1680 = smul.addr %s1679, 4
        %s1681 = scalar_lea.vmem %s7, %s1680
      $region64: #{fused_encode.1} parent=55 // pred_fallthru
        _
    $region56: #{fused_encode.1} parent=5 // pred_fallthru
      _
  $region6: #{fused_encode.1} parent=0 // loop_footer
    %s18 = sadd.s32 1, %s14
  $region7: #{fused_encode.1} parent=0 // loop_footer_branch
    %13 = sbr.rel target = $region3
  $region8: #{fused_encode.1} parent=0 // loop_exit
    _

</llo_original>
